<compile_context>
chip_gen: v5e
topology: v5e:2x2
jax: 0.10.0
libtpu: 0.0.40
codegen_flags: <defaults>
</compile_context>

<pallas_src>
import jax
import jax.numpy as jnp
from jax.experimental import pallas as pl
from jax.experimental.pallas import tpu as pltpu

# ---------------------------------------------------------------------------
# Hyperparameters mirroring MLP_FINAL.__init__ with
# parameters = {'dropout': 0.25, 'no_of_hidden': 2,
#               'units_hiddenlayer0': 64, 'units_hiddenlayer1': 48}
# and const.OUTPUT_DIM = 4.
# ---------------------------------------------------------------------------
N_BINS = 32
HIDDEN = (64, 48)
OUTPUT_DIM = 4

LANE = 128           # lane-dense padded width for the hidden feature dims
MAX_ROW_TILE = 1024  # cap on batch rows per grid step (a few hundred KB of VMEM)


def mlp_kernel(x_ref, w1_ref, w2_ref, w3_ref, b12_ref, b3_ref, o_ref):
    """Fused MLP forward on one (tile, N_BINS) batch tile, all in VMEM."""
    x = x_ref[...]                                            # (T, N_BINS)

    # first_layer -> Dropout(identity, eval) -> ReLU
    h = jnp.dot(x, w1_ref[...], preferred_element_type=jnp.float32)
    h = jnp.maximum(h + b12_ref[0:1, :], 0.0)                 # (T, LANE)

    # middle layer -> Dropout -> ReLU
    h = jnp.dot(h, w2_ref[...], preferred_element_type=jnp.float32)
    h = jnp.maximum(h + b12_ref[1:2, :], 0.0)                 # (T, LANE)

    # final_layer -> Dropout -> Sigmoid, only the real OUTPUT_DIM columns
    z = jnp.dot(h, w3_ref[...], preferred_element_type=jnp.float32)
    o_ref[...] = jax.nn.sigmoid(z + b3_ref[...]).astype(o_ref.dtype)


def prepare_params(params):
    """Zero-pad weights/biases to lane-dense slabs. Call ONCE, outside hot path."""
    w1, b1, w2, b2, w3, b3 = params
    w1p = jnp.zeros((N_BINS, LANE), jnp.float32).at[:, :HIDDEN[0]].set(w1)
    w2p = jnp.zeros((LANE, LANE), jnp.float32).at[:HIDDEN[0], :HIDDEN[1]].set(w2)
    w3p = jnp.zeros((LANE, OUTPUT_DIM), jnp.float32).at[:HIDDEN[1], :].set(w3)
    b12 = jnp.zeros((2, LANE), jnp.float32)
    b12 = b12.at[0, :HIDDEN[0]].set(b1.reshape(-1))
    b12 = b12.at[1, :HIDDEN[1]].set(b2.reshape(-1))
    b3p = b3.reshape(1, OUTPUT_DIM).astype(jnp.float32)
    return w1p, w2p, w3p, b12, b3p


def _round_up(n, m):
    return ((n + m - 1) // m) * m


def _choose_row_tile(batch):
    # Big tiles amortize per-grid-step overhead; keep >=2 steps when there is
    # enough work so v7x megacore ("parallel") can shard across its two TCs.
    if batch <= 256:
        return batch                       # one block == full array dim (legal)
    if batch <= 2 * MAX_ROW_TILE:
        return _round_up(pl.cdiv(batch, 2), 8)
    return MAX_ROW_TILE


@jax.jit
def mlp_final_forward(x, padded_params):
    w1p, w2p, w3p, b12, b3p = padded_params
    batch = x.shape[0]
    tile = _choose_row_tile(batch)
    # Ragged last tile (batch % tile != 0) is handled by Pallas block clipping:
    # out-of-bounds rows are read as unspecified values and their outputs are
    # dropped on writeback -- no jnp.pad copy of x needed.
    grid = (pl.cdiv(batch, tile),)

    flops = 2 * batch * (N_BINS * LANE + LANE * LANE + LANE * OUTPUT_DIM)
    bytes_accessed = 4 * (batch * (N_BINS + OUTPUT_DIM)
                          + N_BINS * LANE + LANE * LANE + LANE * OUTPUT_DIM
                          + 2 * LANE + OUTPUT_DIM)
    cost = pl.CostEstimate(flops=flops,
                           transcendentals=batch * OUTPUT_DIM,
                           bytes_accessed=bytes_accessed)

    return pl.pallas_call(
        mlp_kernel,
        out_shape=jax.ShapeDtypeStruct((batch, OUTPUT_DIM), jnp.float32),
        grid_spec=pltpu.PrefetchScalarGridSpec(
            num_scalar_prefetch=0,
            grid=grid,
            in_specs=[
                # activations: tiled over the batch grid
                pl.BlockSpec((tile, N_BINS), lambda i: (i, 0)),
                # weights / biases: constant index_map -> VMEM-resident
                pl.BlockSpec((N_BINS, LANE), lambda i: (0, 0)),
                pl.BlockSpec((LANE, LANE), lambda i: (0, 0)),
                pl.BlockSpec((LANE, OUTPUT_DIM), lambda i: (0, 0)),
                pl.BlockSpec((2, LANE), lambda i: (0, 0)),
                pl.BlockSpec((1, OUTPUT_DIM), lambda i: (0, 0)),
            ],
            out_specs=pl.BlockSpec((tile, OUTPUT_DIM), lambda i: (i, 0)),
        ),
        compiler_params=pltpu.CompilerParams(
            dimension_semantics=("parallel",),   # megacore-shard batch on v7x
        ),
        cost_estimate=cost,
    )(x, w1p, w2p, w3p, b12, b3p)


def init_params(key):
    """PyTorch-style nn.Linear init: U(-1/sqrt(fan_in), 1/sqrt(fan_in))."""
    def linear(key, fan_in, fan_out):
        kw, kb = jax.random.split(key)
        bound = 1.0 / jnp.sqrt(fan_in)
        w = jax.random.uniform(kw, (fan_in, fan_out), jnp.float32, -bound, bound)
        b = jax.random.uniform(kb, (1, fan_out), jnp.float32, -bound, bound)
        return w, b

    k1, k2, k3 = jax.random.split(key, 3)
    w1, b1 = linear(k1, N_BINS, HIDDEN[0])
    w2, b2 = linear(k2, HIDDEN[0], HIDDEN[1])
    w3, b3 = linear(k3, HIDDEN[1], OUTPUT_DIM)
    return (w1, b1, w2, b2, w3, b3)


def reference_forward(x, params):
    w1, b1, w2, b2, w3, b3 = params
    h = jnp.maximum(x @ w1 + b1, 0.0)
    h = jnp.maximum(h @ w2 + b2, 0.0)
    return jax.nn.sigmoid(h @ w3 + b3)


if __name__ == "__main__":
    key = jax.random.PRNGKey(0)
    kx, kp = jax.random.split(key)

    params = init_params(kp)
    padded_params = prepare_params(params)   # padded once, outside the hot path

    # Even batch: 512 rows -> tile 256, 2 grid steps (megacore-friendly).
    BATCH = 512
    x = jax.random.normal(kx, (BATCH, N_BINS), jnp.float32)
    out = jax.block_until_ready(mlp_final_forward(x, padded_params))
    ref = reference_forward(x, params)
    assert out.shape == (BATCH, OUTPUT_DIM)
    assert jnp.allclose(out, ref, atol=1e-5, rtol=1e-5), "mismatch vs reference"

    # Ragged batch: 500 rows -> tile 256, 2 steps, last block clipped by Pallas.
    x2 = jax.random.normal(kx, (500, N_BINS), jnp.float32)
    out2 = jax.block_until_ready(mlp_final_forward(x2, padded_params))
    ref2 = reference_forward(x2, params)
    assert out2.shape == (500, OUTPUT_DIM)
    assert jnp.allclose(out2, ref2, atol=1e-5, rtol=1e-5), "ragged mismatch"

    print("KERNEL_OK")
</pallas_src>

<mosaic_0001>
module attributes {stable_mosaic.version = 11 : i64} {
  func.func @mlp_kernel(%arg0: i32, %arg1: memref<256x32xf32, #tpu.memory_space<vmem>>, %arg2: memref<32x128xf32, #tpu.memory_space<vmem>>, %arg3: memref<128x128xf32, #tpu.memory_space<vmem>>, %arg4: memref<128x4xf32, #tpu.memory_space<vmem>>, %arg5: memref<2x128xf32, #tpu.memory_space<vmem>>, %arg6: memref<1x4xf32, #tpu.memory_space<vmem>>, %arg7: memref<256x4xf32, #tpu.memory_space<vmem>>) attributes {dimension_semantics = [#tpu.dimension_semantics<parallel>], iteration_bounds = array<i64: 2>, scalar_prefetch = 0 : i64, scratch_operands = 0 : i64, tpu.core_type = #tpu.core_type<tc>, window_params = [{transform_indices = @transform_0, window_bounds = array<i64: 256, 32>}, {pipeline_mode = #tpu.pipeline_mode<synchronous>, transform_indices = @transform_1, window_bounds = array<i64: 32, 128>}, {pipeline_mode = #tpu.pipeline_mode<synchronous>, transform_indices = @transform_2, window_bounds = array<i64: 128, 128>}, {pipeline_mode = #tpu.pipeline_mode<synchronous>, transform_indices = @transform_3, window_bounds = array<i64: 128, 4>}, {pipeline_mode = #tpu.pipeline_mode<synchronous>, transform_indices = @transform_4, window_bounds = array<i64: 2, 128>}, {pipeline_mode = #tpu.pipeline_mode<synchronous>, transform_indices = @transform_5, window_bounds = array<i64: 1, 4>}, {transform_indices = @transform_6, window_bounds = array<i64: 256, 4>}]} {
    %c0 = arith.constant 0 : index
    %c0_0 = arith.constant 0 : index
    %0 = vector.load %arg1[%c0, %c0_0] : memref<256x32xf32, #tpu.memory_space<vmem>>, vector<256x32xf32>
    %c0_1 = arith.constant 0 : index
    %c0_2 = arith.constant 0 : index
    %1 = vector.load %arg2[%c0_1, %c0_2] : memref<32x128xf32, #tpu.memory_space<vmem>>, vector<32x128xf32>
    %cst = arith.constant dense<0.000000e+00> : vector<256x128xf32>
    %2 = tpu.matmul %0, %1, %cst {dimension_numbers = #tpu.dot_dimension_numbers<[1], [0], [0], [1], [0, 0, 1, 1], [], []>} : vector<256x32xf32>, vector<32x128xf32>, vector<256x128xf32> -> vector<256x128xf32>
    %c0_3 = arith.constant 0 : index
    %c0_4 = arith.constant 0 : index
    %3 = vector.load %arg5[%c0_3, %c0_4] : memref<2x128xf32, #tpu.memory_space<vmem>>, vector<1x128xf32>
    %4 = vector.broadcast %3 : vector<1x128xf32> to vector<256x128xf32>
    %5 = arith.addf %2, %4 : vector<256x128xf32>
    %cst_5 = arith.constant 0.000000e+00 : f32
    %6 = vector.broadcast %cst_5 : f32 to vector<256x128xf32>
    %7 = arith.maximumf %5, %6 : vector<256x128xf32>
    %c0_6 = arith.constant 0 : index
    %c0_7 = arith.constant 0 : index
    %8 = vector.load %arg3[%c0_6, %c0_7] : memref<128x128xf32, #tpu.memory_space<vmem>>, vector<128x128xf32>
    %cst_8 = arith.constant dense<0.000000e+00> : vector<256x128xf32>
    %9 = tpu.matmul %7, %8, %cst_8 {dimension_numbers = #tpu.dot_dimension_numbers<[1], [0], [0], [1], [0, 0, 1, 1], [], []>} : vector<256x128xf32>, vector<128x128xf32>, vector<256x128xf32> -> vector<256x128xf32>
    %c1 = arith.constant 1 : index
    %c0_9 = arith.constant 0 : index
    %10 = vector.load %arg5[%c1, %c0_9] : memref<2x128xf32, #tpu.memory_space<vmem>>, vector<1x128xf32>
    %11 = vector.broadcast %10 : vector<1x128xf32> to vector<256x128xf32>
    %12 = arith.addf %9, %11 : vector<256x128xf32>
    %cst_10 = arith.constant 0.000000e+00 : f32
    %13 = vector.broadcast %cst_10 : f32 to vector<256x128xf32>
    %14 = arith.maximumf %12, %13 : vector<256x128xf32>
    %c0_11 = arith.constant 0 : index
    %c0_12 = arith.constant 0 : index
    %15 = vector.load %arg4[%c0_11, %c0_12] : memref<128x4xf32, #tpu.memory_space<vmem>>, vector<128x4xf32>
    %cst_13 = arith.constant dense<0.000000e+00> : vector<256x4xf32>
    %16 = tpu.matmul %14, %15, %cst_13 {dimension_numbers = #tpu.dot_dimension_numbers<[1], [0], [0], [1], [0, 0, 1, 1], [], []>} : vector<256x128xf32>, vector<128x4xf32>, vector<256x4xf32> -> vector<256x4xf32>
    %c0_14 = arith.constant 0 : index
    %c0_15 = arith.constant 0 : index
    %17 = vector.load %arg6[%c0_14, %c0_15] : memref<1x4xf32, #tpu.memory_space<vmem>>, vector<1x4xf32>
    %18 = vector.broadcast %17 : vector<1x4xf32> to vector<256x4xf32>
    %19 = arith.addf %16, %18 : vector<256x4xf32>
    %20 = arith.negf %19 : vector<256x4xf32>
    %21 = math.exp %20 : vector<256x4xf32>
    %cst_16 = arith.constant 1.000000e+00 : f32
    %22 = vector.broadcast %cst_16 : f32 to vector<256x4xf32>
    %23 = arith.addf %22, %21 : vector<256x4xf32>
    %24 = arith.divf %22, %23 : vector<256x4xf32>
    %c0_17 = arith.constant 0 : index
    %c0_18 = arith.constant 0 : index
    %25 = vector.load %arg7[%c0_17, %c0_18] : memref<256x4xf32, #tpu.memory_space<vmem>>, vector<256x4xf32>
    tpu.vector_store %arg7[%c0_17, %c0_18], %24 {strides = array<i32>} : memref<256x4xf32, #tpu.memory_space<vmem>>, vector<256x4xf32>,
    return
  }
  func.func @transform_0(%arg0: i32) -> (i32, i32) {
    %c0_i32 = arith.constant 0 : i32
    %c0_i32_0 = arith.constant 0 : i32
    return %arg0, %c0_i32 : i32, i32
  }
  func.func @transform_1(%arg0: i32) -> (i32, i32) {
    %c0_i32 = arith.constant 0 : i32
    %c0_i32_0 = arith.constant 0 : i32
    %c0_i32_1 = arith.constant 0 : i32
    return %c0_i32, %c0_i32_0 : i32, i32
  }
  func.func @transform_2(%arg0: i32) -> (i32, i32) {
    %c0_i32 = arith.constant 0 : i32
    %c0_i32_0 = arith.constant 0 : i32
    %c0_i32_1 = arith.constant 0 : i32
    return %c0_i32, %c0_i32_0 : i32, i32
  }
  func.func @transform_3(%arg0: i32) -> (i32, i32) {
    %c0_i32 = arith.constant 0 : i32
    %c0_i32_0 = arith.constant 0 : i32
    %c0_i32_1 = arith.constant 0 : i32
    return %c0_i32, %c0_i32_0 : i32, i32
  }
  func.func @transform_4(%arg0: i32) -> (i32, i32) {
    %c0_i32 = arith.constant 0 : i32
    %c0_i32_0 = arith.constant 0 : i32
    %c0_i32_1 = arith.constant 0 : i32
    return %c0_i32, %c0_i32_0 : i32, i32
  }
  func.func @transform_5(%arg0: i32) -> (i32, i32) {
    %c0_i32 = arith.constant 0 : i32
    %c0_i32_0 = arith.constant 0 : i32
    %c0_i32_1 = arith.constant 0 : i32
    return %c0_i32, %c0_i32_0 : i32, i32
  }
  func.func @transform_6(%arg0: i32) -> (i32, i32) {
    %c0_i32 = arith.constant 0 : i32
    %c0_i32_0 = arith.constant 0 : i32
    return %arg0, %c0_i32 : i32, i32
  }
}

</mosaic_0001>

<llo_original>
// kernel: mlp_final_forward.1
$region0: #{mlp_final_forward.1}
  #allocation0 [shape = 'u32[]', space=smem, size = 0x4, offset = 0x4, fixed_abs, tag = 'smem constant byte address 0x4 - core index']
  #allocation1 [shape = 'u32[72,128]{1,0:T(1,128)}', space=vmem, size = 0x9000, scoped, tag = 'internal scratch']
  %s0 = inlined_call_operand.vmem [shape: f32[512,32], index: 0, kind: input, shape index: {}]
  %s1 = inlined_call_operand.vmem [shape: f32[32,128], index: 1, kind: input, shape index: {}]
  %s2 = inlined_call_operand.vmem [shape: f32[128,128], index: 2, kind: input, shape index: {}]
  %s3 = inlined_call_operand.vmem [shape: f32[128,4], index: 3, kind: input, shape index: {}]
  %s4 = inlined_call_operand.vmem [shape: f32[2,128], index: 4, kind: input, shape index: {}]
  %s5 = inlined_call_operand.vmem [shape: f32[1,4], index: 5, kind: input, shape index: {}]
  %s6 = inlined_call_operand.vmem [shape: f32[512,4], index: 6, kind: output, shape index: {}]
  %s7 = sld [smem:[#allocation0]]
  $region57: #{mlp_final_forward.1} parent=0
    _
  %s9 = ssub.s32 1, %s7
  %s10 = scalar_select 0, %s9, %s7
  loop: start=0, step=1, limit=4
  $region2: #{mlp_final_forward.1} parent=0 // loop_pre_header
    _
  $region3: #{mlp_final_forward.1} parent=0 // loop_header
    %s12 = sphi 0, %s16
    %p13 = scmp.ge.s32.totalorder %s12, 4
    %s22 = sphi 0, %s24
    %s25 = sphi 0, %s22
    %s26 = sphi 0, %s25
    %s42 = sphi 0, %s26
    %s46 = sphi 0, %s46
    %s48 = sphi 0, %s46
    %s49 = sphi 0, %s48
    %s63 = sphi 0, %s49
    %s67 = sphi 0, %s67
    %s69 = sphi 0, %s67
    %s70 = sphi 0, %s69
    %s84 = sphi 0, %s70
    %s88 = sphi 0, %s88
    %s90 = sphi 0, %s88
    %s91 = sphi 0, %s90
    %s105 = sphi 0, %s91
    %s109 = sphi 0, %s109
    %s111 = sphi 0, %s109
    %s112 = sphi 0, %s111
    %s126 = sphi 0, %s112
    %s130 = sphi 0, %s130
    %s132 = sphi 0, %s130
    %s133 = sphi 0, %s132
    %s147 = sphi 0, %s133
    %s153 = sphi 0, %s155
    %s156 = sphi 0, %s153
    %s157 = sphi 0, %s156
    %s173 = sphi 0, %s157
  $region4: #{mlp_final_forward.1} parent=0 // loop_header_branch
    %15 = sbr.rel (%p13) target = $region8
  $region5: #{mlp_final_forward.1} parent=0 // loop_body
    %s17 = ssub.s32 %s12, 1
    %s18 = ssub.s32 %s12, 2
    %s19 = sadd.s32 %s12, 1
    %s20 = ssub.s32 %s12, %s19
    %p21 = scmp.eq.s32.totalorder %s20, 0
    %s23 = sadd.s32 %s22, 1
    %s24 = scalar_select %p21, %s22, %s23
    %p27 = pneg %p21
    %p28 = scmp.eq.s32.totalorder %s12, 1
    %p29 = por %p27, %p28
    %p30 = scmp.ne.s32.totalorder %s22, %s25
    %p31 = scmp.eq.s32.totalorder %s12, 0
    %p32 = por %p30, %p31
    %p33 = scmp.ne.s32.totalorder %s22, %s25
    %p34 = scmp.eq.s32.totalorder %s17, 1
    %p35 = por %p33, %p34
    %p36 = scmp.ne.s32.totalorder %s25, %s26
    %p37 = scmp.eq.s32.totalorder %s17, 0
    %p38 = por %p36, %p37
    %p39 = scmp.ne.s32.totalorder %s25, %s26
    %p40 = scmp.eq.s32.totalorder %s18, 1
    %p41 = por %p39, %p40
    %p43 = scmp.ne.s32.totalorder %s26, %s42
    %p44 = scmp.eq.s32.totalorder %s18, 0
    %p45 = por %p43, %p44
    %s47 = sadd.s32 %s46, 1
    %p50 = scmp.eq.s32.totalorder %s12, 1
    %p51 = scmp.ne.s32.totalorder %s46, %s48
    %p52 = scmp.eq.s32.totalorder %s12, 0
    %p53 = por %p51, %p52
    %p54 = scmp.ne.s32.totalorder %s46, %s48
    %p55 = scmp.eq.s32.totalorder %s17, 1
    %p56 = por %p54, %p55
    %p57 = scmp.ne.s32.totalorder %s48, %s49
    %p58 = scmp.eq.s32.totalorder %s17, 0
    %p59 = por %p57, %p58
    %p60 = scmp.ne.s32.totalorder %s48, %s49
    %p61 = scmp.eq.s32.totalorder %s18, 1
    %p62 = por %p60, %p61
    %p64 = scmp.ne.s32.totalorder %s49, %s63
    %p65 = scmp.eq.s32.totalorder %s18, 0
    %p66 = por %p64, %p65
    %s68 = sadd.s32 %s67, 1
    %p71 = scmp.eq.s32.totalorder %s12, 1
    %p72 = scmp.ne.s32.totalorder %s67, %s69
    %p73 = scmp.eq.s32.totalorder %s12, 0
    %p74 = por %p72, %p73
    %p75 = scmp.ne.s32.totalorder %s67, %s69
    %p76 = scmp.eq.s32.totalorder %s17, 1
    %p77 = por %p75, %p76
    %p78 = scmp.ne.s32.totalorder %s69, %s70
    %p79 = scmp.eq.s32.totalorder %s17, 0
    %p80 = por %p78, %p79
    %p81 = scmp.ne.s32.totalorder %s69, %s70
    %p82 = scmp.eq.s32.totalorder %s18, 1
    %p83 = por %p81, %p82
    %p85 = scmp.ne.s32.totalorder %s70, %s84
    %p86 = scmp.eq.s32.totalorder %s18, 0
    %p87 = por %p85, %p86
    %s89 = sadd.s32 %s88, 1
    %p92 = scmp.eq.s32.totalorder %s12, 1
    %p93 = scmp.ne.s32.totalorder %s88, %s90
    %p94 = scmp.eq.s32.totalorder %s12, 0
    %p95 = por %p93, %p94
    %p96 = scmp.ne.s32.totalorder %s88, %s90
    %p97 = scmp.eq.s32.totalorder %s17, 1
    %p98 = por %p96, %p97
    %p99 = scmp.ne.s32.totalorder %s90, %s91
    %p100 = scmp.eq.s32.totalorder %s17, 0
    %p101 = por %p99, %p100
    %p102 = scmp.ne.s32.totalorder %s90, %s91
    %p103 = scmp.eq.s32.totalorder %s18, 1
    %p104 = por %p102, %p103
    %p106 = scmp.ne.s32.totalorder %s91, %s105
    %p107 = scmp.eq.s32.totalorder %s18, 0
    %p108 = por %p106, %p107
    %s110 = sadd.s32 %s109, 1
    %p113 = scmp.eq.s32.totalorder %s12, 1
    %p114 = scmp.ne.s32.totalorder %s109, %s111
    %p115 = scmp.eq.s32.totalorder %s12, 0
    %p116 = por %p114, %p115
    %p117 = scmp.ne.s32.totalorder %s109, %s111
    %p118 = scmp.eq.s32.totalorder %s17, 1
    %p119 = por %p117, %p118
    %p120 = scmp.ne.s32.totalorder %s111, %s112
    %p121 = scmp.eq.s32.totalorder %s17, 0
    %p122 = por %p120, %p121
    %p123 = scmp.ne.s32.totalorder %s111, %s112
    %p124 = scmp.eq.s32.totalorder %s18, 1
    %p125 = por %p123, %p124
    %p127 = scmp.ne.s32.totalorder %s112, %s126
    %p128 = scmp.eq.s32.totalorder %s18, 0
    %p129 = por %p127, %p128
    %s131 = sadd.s32 %s130, 1
    %p134 = scmp.eq.s32.totalorder %s12, 1
    %p135 = scmp.ne.s32.totalorder %s130, %s132
    %p136 = scmp.eq.s32.totalorder %s12, 0
    %p137 = por %p135, %p136
    %p138 = scmp.ne.s32.totalorder %s130, %s132
    %p139 = scmp.eq.s32.totalorder %s17, 1
    %p140 = por %p138, %p139
    %p141 = scmp.ne.s32.totalorder %s132, %s133
    %p142 = scmp.eq.s32.totalorder %s17, 0
    %p143 = por %p141, %p142
    %p144 = scmp.ne.s32.totalorder %s132, %s133
    %p145 = scmp.eq.s32.totalorder %s18, 1
    %p146 = por %p144, %p145
    %p148 = scmp.ne.s32.totalorder %s133, %s147
    %p149 = scmp.eq.s32.totalorder %s18, 0
    %p150 = por %p148, %p149
    %s151 = ssub.s32 %s12, %s19
    %p152 = scmp.eq.s32.totalorder %s151, 0
    %s154 = sadd.s32 %s153, 1
    %s155 = scalar_select %p152, %s153, %s154
    %p158 = pneg %p152
    %p159 = scmp.eq.s32.totalorder %s12, 1
    %p160 = por %p158, %p159
    %p161 = scmp.ne.s32.totalorder %s153, %s156
    %p162 = scmp.eq.s32.totalorder %s12, 0
    %p163 = por %p161, %p162
    %p164 = scmp.ne.s32.totalorder %s153, %s156
    %p165 = scmp.eq.s32.totalorder %s17, 1
    %p166 = por %p164, %p165
    %p167 = scmp.ne.s32.totalorder %s156, %s157
    %p168 = scmp.eq.s32.totalorder %s17, 0
    %p169 = por %p167, %p168
    %p170 = scmp.ne.s32.totalorder %s156, %s157
    %p171 = scmp.eq.s32.totalorder %s18, 1
    %p172 = por %p170, %p171
    %p174 = scmp.ne.s32.totalorder %s157, %s173
    %p175 = scmp.eq.s32.totalorder %s18, 0
    %p176 = por %p174, %p175
    %p177 = scmp.le.s32.totalorder 1, %s12
    %p178 = scmp.lt.s32.totalorder %s12, 3
    %p179 = pnand %p177, %p178
    %p180 = pneg %p179
    // Predicated region
    $region9: #{mlp_final_forward.1} parent=5 // pred_check
      _
    $region10: #{mlp_final_forward.1} parent=5 // pred_check_branch
      %182 = sbr.rel (%p179) target = $region12
    $region11: #{mlp_final_forward.1} parent=5 // pred_region
      %s183 = ssub.s32 %s12, 1
      // Predicated region
      $region13: #{mlp_final_forward.1} parent=11 // pred_check
        %p184 = pneg %p59
      $region14: #{mlp_final_forward.1} parent=11 // pred_check_branch
        %186 = sbr.rel (%p184) target = $region16
      $region15: #{mlp_final_forward.1} parent=11 // pred_region
        _
      $region16: #{mlp_final_forward.1} parent=11 // pred_fallthru
        _
      // Predicated region
      $region17: #{mlp_final_forward.1} parent=11 // pred_check
        %p187 = pneg %p80
      $region18: #{mlp_final_forward.1} parent=11 // pred_check_branch
        %189 = sbr.rel (%p187) target = $region20
      $region19: #{mlp_final_forward.1} parent=11 // pred_region
        _
      $region20: #{mlp_final_forward.1} parent=11 // pred_fallthru
        _
      // Predicated region
      $region21: #{mlp_final_forward.1} parent=11 // pred_check
        %p190 = pneg %p101
      $region22: #{mlp_final_forward.1} parent=11 // pred_check_branch
        %192 = sbr.rel (%p190) target = $region24
      $region23: #{mlp_final_forward.1} parent=11 // pred_region
        _
      $region24: #{mlp_final_forward.1} parent=11 // pred_fallthru
        _
      // Predicated region
      $region25: #{mlp_final_forward.1} parent=11 // pred_check
        %p193 = pneg %p122
      $region26: #{mlp_final_forward.1} parent=11 // pred_check_branch
        %195 = sbr.rel (%p193) target = $region28
      $region27: #{mlp_final_forward.1} parent=11 // pred_region
        _
      $region28: #{mlp_final_forward.1} parent=11 // pred_fallthru
        _
      // Predicated region
      $region29: #{mlp_final_forward.1} parent=11 // pred_check
        %p196 = pneg %p143
      $region30: #{mlp_final_forward.1} parent=11 // pred_check_branch
        %198 = sbr.rel (%p196) target = $region32
      $region31: #{mlp_final_forward.1} parent=11 // pred_region
        _
      $region32: #{mlp_final_forward.1} parent=11 // pred_fallthru
        _
    $region12: #{mlp_final_forward.1} parent=5 // pred_fallthru
      _
    %p199 = scmp.lt.s32.totalorder %s12, 2
    // Predicated region
    $region33: #{mlp_final_forward.1} parent=5 // pred_check
      %p200 = pneg %p199
    $region34: #{mlp_final_forward.1} parent=5 // pred_check_branch
      %202 = sbr.rel (%p200) target = $region36
    $region35: #{mlp_final_forward.1} parent=5 // pred_region
      // Predicated region
      $region37: #{mlp_final_forward.1} parent=35 // pred_check
        %p203 = pneg %p32
      $region38: #{mlp_final_forward.1} parent=35 // pred_check_branch
        %205 = sbr.rel (%p203) target = $region40
      $region39: #{mlp_final_forward.1} parent=35 // pred_region
        %s206 = smul.u32 32, %s12
        %p207 = scmp.lt.s32.totalorder %s206, 63
        %s208 = scalar_select %p207, %s206, 63
        %s209 = smul.addr %s208, 8
        %s210 = scalar_lea.vmem %s0, %s209
        %s211 = smul.u32 32, %s12
      $region40: #{mlp_final_forward.1} parent=35 // pred_fallthru
        _
    $region36: #{mlp_final_forward.1} parent=5 // pred_fallthru
      _
    %p212 = scmp.le.s32.totalorder 1, %s12
    %p213 = scmp.lt.s32.totalorder %s12, 3
    %p214 = pnand %p212, %p213
    %p215 = pneg %p214
    // Predicated region
    $region41: #{mlp_final_forward.1} parent=5 // pred_check
      _
    $region42: #{mlp_final_forward.1} parent=5 // pred_check_branch
      %217 = sbr.rel (%p214) target = $region44
    $region43: #{mlp_final_forward.1} parent=5 // pred_region
      %s218 = ssub.s32 %s12, 1
      %s219 = smul.u32 32, %s17
      %p220 = scmp.lt.s32.totalorder %s219, 63
      %s221 = scalar_select %p220, %s219, 63
      %s222 = smul.addr %s221, 8
      %s223 = scalar_lea.vmem %s0, %s222
      %p224 = pneg %p38
      %p225 = pneg %p35
      %p226 = pneg %p59
      %p227 = pneg %p56
      %p228 = pneg %p80
      %p229 = pneg %p77
      %p230 = pneg %p101
      %p231 = pneg %p98
      %p232 = pneg %p122
      %p233 = pneg %p119
      %p234 = pneg %p143
      %p235 = pneg %p140
      %p236 = pneg %p169
      %p237 = pneg %p166
      %s238 = smul.u32 32, %s17
      %p239 = scmp.lt.s32.totalorder %s238, 63
      %s240 = scalar_select %p239, %s238, 63
      %s241 = smul.addr %s240, 8
      %s242 = scalar_lea.vmem %s6, %s241
      %s243 = smul.u32 32, %s17
      %p244 = scmp.lt.s32.totalorder %s243, 63
      %s245 = scalar_select %p244, %s243, 63
      %s246 = smul.addr %s245, 8
      %s247 = scalar_lea.vmem %s0, %s246
      %s248 = smul.u32 32, %s17
      %s249 = smul.u32 32, %s17
      %p250 = scmp.lt.s32.totalorder %s249, 63
      %s251 = scalar_select %p250, %s249, 63
      %s252 = smul.addr %s251, 8
      %s253 = scalar_lea.vmem %s6, %s252
      %s254 = smul.u32 32, %s17
      %v255 = vld [vmem:[%s247] sm:$0xff]
      %v256 = vld [vmem:[%s247 + $0x8] sm:$0xff]
      %v257 = vld [vmem:[%s247 + $0x10] sm:$0xff]
      %v258 = vld [vmem:[%s247 + $0x18] sm:$0xff]
      %v259 = vld [vmem:[%s247 + $0x20] sm:$0xff]
      %v260 = vld [vmem:[%s247 + $0x28] sm:$0xff]
      %v261 = vld [vmem:[%s247 + $0x30] sm:$0xff]
      %v262 = vld [vmem:[%s247 + $0x38] sm:$0xff]
      %v263 = vld [vmem:[%s247 + $0x40] sm:$0xff]
      %v264 = vld [vmem:[%s247 + $0x48] sm:$0xff]
      %v265 = vld [vmem:[%s247 + $0x50] sm:$0xff]
      %v266 = vld [vmem:[%s247 + $0x58] sm:$0xff]
      %v267 = vld [vmem:[%s247 + $0x60] sm:$0xff]
      %v268 = vld [vmem:[%s247 + $0x68] sm:$0xff]
      %v269 = vld [vmem:[%s247 + $0x70] sm:$0xff]
      %v270 = vld [vmem:[%s247 + $0x78] sm:$0xff]
      %v271 = vld [vmem:[%s247 + $0x80] sm:$0xff]
      %v272 = vld [vmem:[%s247 + $0x88] sm:$0xff]
      %v273 = vld [vmem:[%s247 + $0x90] sm:$0xff]
      %v274 = vld [vmem:[%s247 + $0x98] sm:$0xff]
      %v275 = vld [vmem:[%s247 + $0xa0] sm:$0xff]
      %v276 = vld [vmem:[%s247 + $0xa8] sm:$0xff]
      %v277 = vld [vmem:[%s247 + $0xb0] sm:$0xff]
      %v278 = vld [vmem:[%s247 + $0xb8] sm:$0xff]
      %v279 = vld [vmem:[%s247 + $0xc0] sm:$0xff]
      %v280 = vld [vmem:[%s247 + $0xc8] sm:$0xff]
      %v281 = vld [vmem:[%s247 + $0xd0] sm:$0xff]
      %v282 = vld [vmem:[%s247 + $0xd8] sm:$0xff]
      %v283 = vld [vmem:[%s247 + $0xe0] sm:$0xff]
      %v284 = vld [vmem:[%s247 + $0xe8] sm:$0xff]
      %v285 = vld [vmem:[%s247 + $0xf0] sm:$0xff]
      %v286 = vld [vmem:[%s247 + $0xf8] sm:$0xff]
      %v287 = vld [vmem:[%s1] sm:$0xff]
      %v288 = vld [vmem:[%s1 + $0x8] sm:$0xff]
      %v289 = vld [vmem:[%s1 + $0x10] sm:$0xff]
      %v290 = vld [vmem:[%s1 + $0x18] sm:$0xff]
      %v291 = vld [vmem:[%s4] sm:$0x1]
      %v292 = vperm.slane %v291, 0
      %vm293 = vcmask 261120
      %v295 = vsel %vm293, %v255, 0
      %v298 = vsel %vm293, %v256, 0
      %v301 = vsel %vm293, %v257, 0
      %v304 = vsel %vm293, %v258, 0
      %v307 = vsel %vm293, %v259, 0
      %v310 = vsel %vm293, %v260, 0
      %v313 = vsel %vm293, %v261, 0
      %v316 = vsel %vm293, %v262, 0
      %v319 = vsel %vm293, %v263, 0
      %v322 = vsel %vm293, %v264, 0
      %v325 = vsel %vm293, %v265, 0
      %v328 = vsel %vm293, %v266, 0
      %v331 = vsel %vm293, %v267, 0
      %v334 = vsel %vm293, %v268, 0
      %v337 = vsel %vm293, %v269, 0
      %v340 = vsel %vm293, %v270, 0
      %v343 = vsel %vm293, %v271, 0
      %v346 = vsel %vm293, %v272, 0
      %v349 = vsel %vm293, %v273, 0
      %v352 = vsel %vm293, %v274, 0
      %v355 = vsel %vm293, %v275, 0
      %v358 = vsel %vm293, %v276, 0
      %v361 = vsel %vm293, %v277, 0
      %v364 = vsel %vm293, %v278, 0
      %v367 = vsel %vm293, %v279, 0
      %v370 = vsel %vm293, %v280, 0
      %v373 = vsel %vm293, %v281, 0
      %v376 = vsel %vm293, %v282, 0
      %v379 = vsel %vm293, %v283, 0
      %v382 = vsel %vm293, %v284, 0
      %v385 = vsel %vm293, %v285, 0
      %v388 = vsel %vm293, %v286, 0
      %390 = vmatpush.msra.mxu0 0.0
      %391 = vmatpush.msra.mxu0 0.0
      %392 = vmatpush.msra.mxu0 0.0
      %393 = vmatpush.msra.mxu0 0.0
      %394 = vmatpush.msra.mxu0 0.0
      %395 = vmatpush.msra.mxu0 0.0
      %396 = vmatpush.msra.mxu0 0.0
      %397 = vmatpush.msra.mxu0 0.0
      %398 = vmatpush.msra.mxu0 0.0
      %399 = vmatpush.msra.mxu0 0.0
      %400 = vmatpush.msra.mxu0 0.0
      %401 = vmatpush.msra.mxu0 0.0
      %402 = vmatpush.msra.mxu0 %v290
      %403 = vmatpush.msra.mxu0 %v289
      %404 = vmatpush.msra.mxu0 %v288
      %405 = vmatpush.msra.mxu0 %v287
      %406 = vmatmul.f32.gmra.mxu0 %v295
      %v407 = vpop.f32.mrf.mxu0
      %v408 = vadd.f32 %v292, %v407
      %409 = vmatmul.f32.gmra.mxu0 %v298
      %v410 = vpop.f32.mrf.mxu0
      %v411 = vadd.f32 %v292, %v410
      %412 = vmatmul.f32.gmra.mxu0 %v301
      %v413 = vpop.f32.mrf.mxu0
      %v414 = vadd.f32 %v292, %v413
      %415 = vmatmul.f32.gmra.mxu0 %v304
      %v416 = vpop.f32.mrf.mxu0
      %v417 = vadd.f32 %v292, %v416
      %418 = vmatmul.f32.gmra.mxu0 %v307
      %v419 = vpop.f32.mrf.mxu0
      %v420 = vadd.f32 %v292, %v419
      %421 = vmatmul.f32.gmra.mxu0 %v310
      %v422 = vpop.f32.mrf.mxu0
      %v423 = vadd.f32 %v292, %v422
      %424 = vmatmul.f32.gmra.mxu0 %v313
      %v425 = vpop.f32.mrf.mxu0
      %v426 = vadd.f32 %v292, %v425
      %427 = vmatmul.f32.gmra.mxu0 %v316
      %v428 = vpop.f32.mrf.mxu0
      %v429 = vadd.f32 %v292, %v428
      %430 = vmatmul.f32.gmra.mxu0 %v319
      %v431 = vpop.f32.mrf.mxu0
      %v432 = vadd.f32 %v292, %v431
      %433 = vmatmul.f32.gmra.mxu0 %v322
      %v434 = vpop.f32.mrf.mxu0
      %v435 = vadd.f32 %v292, %v434
      %436 = vmatmul.f32.gmra.mxu0 %v325
      %v437 = vpop.f32.mrf.mxu0
      %v438 = vadd.f32 %v292, %v437
      %439 = vmatmul.f32.gmra.mxu0 %v328
      %v440 = vpop.f32.mrf.mxu0
      %v441 = vadd.f32 %v292, %v440
      %442 = vmatmul.f32.gmra.mxu0 %v331
      %v443 = vpop.f32.mrf.mxu0
      %v444 = vadd.f32 %v292, %v443
      %445 = vmatmul.f32.gmra.mxu0 %v334
      %v446 = vpop.f32.mrf.mxu0
      %v447 = vadd.f32 %v292, %v446
      %448 = vmatmul.f32.gmra.mxu0 %v337
      %v449 = vpop.f32.mrf.mxu0
      %v450 = vadd.f32 %v292, %v449
      %451 = vmatmul.f32.gmra.mxu0 %v340
      %v452 = vpop.f32.mrf.mxu0
      %v453 = vadd.f32 %v292, %v452
      %454 = vmatmul.f32.gmra.mxu0 %v343
      %v455 = vpop.f32.mrf.mxu0
      %v456 = vadd.f32 %v292, %v455
      %457 = vmatmul.f32.gmra.mxu0 %v346
      %v458 = vpop.f32.mrf.mxu0
      %v459 = vadd.f32 %v292, %v458
      %460 = vmatmul.f32.gmra.mxu0 %v349
      %v461 = vpop.f32.mrf.mxu0
      %v462 = vadd.f32 %v292, %v461
      %463 = vmatmul.f32.gmra.mxu0 %v352
      %v464 = vpop.f32.mrf.mxu0
      %v465 = vadd.f32 %v292, %v464
      %466 = vmatmul.f32.gmra.mxu0 %v355
      %v467 = vpop.f32.mrf.mxu0
      %v468 = vadd.f32 %v292, %v467
      %469 = vmatmul.f32.gmra.mxu0 %v358
      %v470 = vpop.f32.mrf.mxu0
      %v471 = vadd.f32 %v292, %v470
      %472 = vmatmul.f32.gmra.mxu0 %v361
      %v473 = vpop.f32.mrf.mxu0
      %v474 = vadd.f32 %v292, %v473
      %475 = vmatmul.f32.gmra.mxu0 %v364
      %v476 = vpop.f32.mrf.mxu0
      %v477 = vadd.f32 %v292, %v476
      %478 = vmatmul.f32.gmra.mxu0 %v367
      %v479 = vpop.f32.mrf.mxu0
      %v480 = vadd.f32 %v292, %v479
      %481 = vmatmul.f32.gmra.mxu0 %v370
      %v482 = vpop.f32.mrf.mxu0
      %v483 = vadd.f32 %v292, %v482
      %484 = vmatmul.f32.gmra.mxu0 %v373
      %v485 = vpop.f32.mrf.mxu0
      %v486 = vadd.f32 %v292, %v485
      %487 = vmatmul.f32.gmra.mxu0 %v376
      %v488 = vpop.f32.mrf.mxu0
      %v489 = vadd.f32 %v292, %v488
      %490 = vmatmul.f32.gmra.mxu0 %v379
      %v491 = vpop.f32.mrf.mxu0
      %v492 = vadd.f32 %v292, %v491
      %493 = vmatmul.f32.gmra.mxu0 %v382
      %v494 = vpop.f32.mrf.mxu0
      %v495 = vadd.f32 %v292, %v494
      %496 = vmatmul.f32.gmra.mxu0 %v385
      %v497 = vpop.f32.mrf.mxu0
      %v498 = vadd.f32 %v292, %v497
      %499 = vmatmul.f32.gmra.mxu0 %v388
      %v500 = vpop.f32.mrf.mxu0
      %v501 = vadd.f32 %v292, %v500
      %502 = vdwg.mxu0
      %v503 = vmax.f32 %v408, 0.0
      %v504 = vmax.f32 %v411, 0.0
      %v505 = vmax.f32 %v414, 0.0
      %v506 = vmax.f32 %v417, 0.0
      %v507 = vmax.f32 %v420, 0.0
      %v508 = vmax.f32 %v423, 0.0
      %v509 = vmax.f32 %v426, 0.0
      %v510 = vmax.f32 %v429, 0.0
      %v511 = vmax.f32 %v432, 0.0
      %v512 = vmax.f32 %v435, 0.0
      %v513 = vmax.f32 %v438, 0.0
      %v514 = vmax.f32 %v441, 0.0
      %v515 = vmax.f32 %v444, 0.0
      %v516 = vmax.f32 %v447, 0.0
      %v517 = vmax.f32 %v450, 0.0
      %v518 = vmax.f32 %v453, 0.0
      %v519 = vmax.f32 %v456, 0.0
      %v520 = vmax.f32 %v459, 0.0
      %v521 = vmax.f32 %v462, 0.0
      %v522 = vmax.f32 %v465, 0.0
      %v523 = vmax.f32 %v468, 0.0
      %v524 = vmax.f32 %v471, 0.0
      %v525 = vmax.f32 %v474, 0.0
      %v526 = vmax.f32 %v477, 0.0
      %v527 = vmax.f32 %v480, 0.0
      %v528 = vmax.f32 %v483, 0.0
      %v529 = vmax.f32 %v486, 0.0
      %v530 = vmax.f32 %v489, 0.0
      %v531 = vmax.f32 %v492, 0.0
      %v532 = vmax.f32 %v495, 0.0
      %v533 = vmax.f32 %v498, 0.0
      %v534 = vmax.f32 %v501, 0.0
      %v535 = vld [vmem:[%s2] sm:$0xff]
      %v536 = vld [vmem:[%s2 + $0x8] sm:$0xff]
      %v537 = vld [vmem:[%s2 + $0x10] sm:$0xff]
      %v538 = vld [vmem:[%s2 + $0x18] sm:$0xff]
      %v539 = vld [vmem:[%s2 + $0x20] sm:$0xff]
      %v540 = vld [vmem:[%s2 + $0x28] sm:$0xff]
      %v541 = vld [vmem:[%s2 + $0x30] sm:$0xff]
      %v542 = vld [vmem:[%s2 + $0x38] sm:$0xff]
      %v543 = vld [vmem:[%s2 + $0x40] sm:$0xff]
      %v544 = vld [vmem:[%s2 + $0x48] sm:$0xff]
      %v545 = vld [vmem:[%s2 + $0x50] sm:$0xff]
      %v546 = vld [vmem:[%s2 + $0x58] sm:$0xff]
      %v547 = vld [vmem:[%s2 + $0x60] sm:$0xff]
      %v548 = vld [vmem:[%s2 + $0x68] sm:$0xff]
      %v549 = vld [vmem:[%s2 + $0x70] sm:$0xff]
      %v550 = vld [vmem:[%s2 + $0x78] sm:$0xff]
      %v551 = vld [vmem:[%s4 + $0x1] sm:$0x1]
      %v552 = vperm.slane %v551, 0
      %553 = vmatpush.msra.mxu0 %v550
      %554 = vmatpush.msra.mxu0 %v549
      %555 = vmatpush.msra.mxu0 %v548
      %556 = vmatpush.msra.mxu0 %v547
      %557 = vmatpush.msra.mxu0 %v546
      %558 = vmatpush.msra.mxu0 %v545
      %559 = vmatpush.msra.mxu0 %v544
      %560 = vmatpush.msra.mxu0 %v543
      %561 = vmatpush.msra.mxu0 %v542
      %562 = vmatpush.msra.mxu0 %v541
      %563 = vmatpush.msra.mxu0 %v540
      %564 = vmatpush.msra.mxu0 %v539
      %565 = vmatpush.msra.mxu0 %v538
      %566 = vmatpush.msra.mxu0 %v537
      %567 = vmatpush.msra.mxu0 %v536
      %568 = vmatpush.msra.mxu0 %v535
      %569 = vmatmul.f32.gmra.mxu0 %v503
      %v570 = vpop.f32.mrf.mxu0
      %v571 = vadd.f32 %v552, %v570
      %572 = vmatmul.f32.gmra.mxu0 %v504
      %v573 = vpop.f32.mrf.mxu0
      %v574 = vadd.f32 %v552, %v573
      %575 = vmatmul.f32.gmra.mxu0 %v505
      %v576 = vpop.f32.mrf.mxu0
      %v577 = vadd.f32 %v552, %v576
      %578 = vmatmul.f32.gmra.mxu0 %v506
      %v579 = vpop.f32.mrf.mxu0
      %v580 = vadd.f32 %v552, %v579
      %581 = vmatmul.f32.gmra.mxu0 %v507
      %v582 = vpop.f32.mrf.mxu0
      %v583 = vadd.f32 %v552, %v582
      %584 = vmatmul.f32.gmra.mxu0 %v508
      %v585 = vpop.f32.mrf.mxu0
      %v586 = vadd.f32 %v552, %v585
      %587 = vmatmul.f32.gmra.mxu0 %v509
      %v588 = vpop.f32.mrf.mxu0
      %v589 = vadd.f32 %v552, %v588
      %590 = vmatmul.f32.gmra.mxu0 %v510
      %v591 = vpop.f32.mrf.mxu0
      %v592 = vadd.f32 %v552, %v591
      %593 = vmatmul.f32.gmra.mxu0 %v511
      %v594 = vpop.f32.mrf.mxu0
      %v595 = vadd.f32 %v552, %v594
      %596 = vmatmul.f32.gmra.mxu0 %v512
      %v597 = vpop.f32.mrf.mxu0
      %v598 = vadd.f32 %v552, %v597
      %599 = vmatmul.f32.gmra.mxu0 %v513
      %v600 = vpop.f32.mrf.mxu0
      %v601 = vadd.f32 %v552, %v600
      %602 = vmatmul.f32.gmra.mxu0 %v514
      %v603 = vpop.f32.mrf.mxu0
      %v604 = vadd.f32 %v552, %v603
      %605 = vmatmul.f32.gmra.mxu0 %v515
      %v606 = vpop.f32.mrf.mxu0
      %v607 = vadd.f32 %v552, %v606
      %608 = vmatmul.f32.gmra.mxu0 %v516
      %v609 = vpop.f32.mrf.mxu0
      %v610 = vadd.f32 %v552, %v609
      %611 = vmatmul.f32.gmra.mxu0 %v517
      %v612 = vpop.f32.mrf.mxu0
      %v613 = vadd.f32 %v552, %v612
      %614 = vmatmul.f32.gmra.mxu0 %v518
      %v615 = vpop.f32.mrf.mxu0
      %v616 = vadd.f32 %v552, %v615
      %617 = vmatmul.f32.gmra.mxu0 %v519
      %v618 = vpop.f32.mrf.mxu0
      %v619 = vadd.f32 %v552, %v618
      %620 = vmatmul.f32.gmra.mxu0 %v520
      %v621 = vpop.f32.mrf.mxu0
      %v622 = vadd.f32 %v552, %v621
      %623 = vmatmul.f32.gmra.mxu0 %v521
      %v624 = vpop.f32.mrf.mxu0
      %v625 = vadd.f32 %v552, %v624
      %626 = vmatmul.f32.gmra.mxu0 %v522
      %v627 = vpop.f32.mrf.mxu0
      %v628 = vadd.f32 %v552, %v627
      %629 = vmatmul.f32.gmra.mxu0 %v523
      %v630 = vpop.f32.mrf.mxu0
      %v631 = vadd.f32 %v552, %v630
      %632 = vmatmul.f32.gmra.mxu0 %v524
      %v633 = vpop.f32.mrf.mxu0
      %v634 = vadd.f32 %v552, %v633
      %635 = vmatmul.f32.gmra.mxu0 %v525
      %v636 = vpop.f32.mrf.mxu0
      %v637 = vadd.f32 %v552, %v636
      %638 = vmatmul.f32.gmra.mxu0 %v526
      %v639 = vpop.f32.mrf.mxu0
      %v640 = vadd.f32 %v552, %v639
      %641 = vmatmul.f32.gmra.mxu0 %v527
      %v642 = vpop.f32.mrf.mxu0
      %v643 = vadd.f32 %v552, %v642
      %644 = vmatmul.f32.gmra.mxu0 %v528
      %v645 = vpop.f32.mrf.mxu0
      %v646 = vadd.f32 %v552, %v645
      %647 = vmatmul.f32.gmra.mxu0 %v529
      %v648 = vpop.f32.mrf.mxu0
      %v649 = vadd.f32 %v552, %v648
      %650 = vmatmul.f32.gmra.mxu0 %v530
      %v651 = vpop.f32.mrf.mxu0
      %v652 = vadd.f32 %v552, %v651
      %653 = vmatmul.f32.gmra.mxu0 %v531
      %v654 = vpop.f32.mrf.mxu0
      %v655 = vadd.f32 %v552, %v654
      %656 = vmatmul.f32.gmra.mxu0 %v532
      %v657 = vpop.f32.mrf.mxu0
      %v658 = vadd.f32 %v552, %v657
      %659 = vmatmul.f32.gmra.mxu0 %v533
      %v660 = vpop.f32.mrf.mxu0
      %v661 = vadd.f32 %v552, %v660
      %662 = vmatmul.f32.gmra.mxu0 %v534
      %v663 = vpop.f32.mrf.mxu0
      %v664 = vadd.f32 %v552, %v663
      %665 = vdwg.mxu0
      %v666 = vmax.f32 %v571, 0.0
      %v667 = vmax.f32 %v574, 0.0
      %v668 = vmax.f32 %v577, 0.0
      %v669 = vmax.f32 %v580, 0.0
      %v670 = vmax.f32 %v583, 0.0
      %v671 = vmax.f32 %v586, 0.0
      %v672 = vmax.f32 %v589, 0.0
      %v673 = vmax.f32 %v592, 0.0
      %v674 = vmax.f32 %v595, 0.0
      %v675 = vmax.f32 %v598, 0.0
      %v676 = vmax.f32 %v601, 0.0
      %v677 = vmax.f32 %v604, 0.0
      %v678 = vmax.f32 %v607, 0.0
      %v679 = vmax.f32 %v610, 0.0
      %v680 = vmax.f32 %v613, 0.0
      %v681 = vmax.f32 %v616, 0.0
      %v682 = vmax.f32 %v619, 0.0
      %v683 = vmax.f32 %v622, 0.0
      %v684 = vmax.f32 %v625, 0.0
      %v685 = vmax.f32 %v628, 0.0
      %v686 = vmax.f32 %v631, 0.0
      %v687 = vmax.f32 %v634, 0.0
      %v688 = vmax.f32 %v637, 0.0
      %v689 = vmax.f32 %v640, 0.0
      %v690 = vmax.f32 %v643, 0.0
      %v691 = vmax.f32 %v646, 0.0
      %v692 = vmax.f32 %v649, 0.0
      %v693 = vmax.f32 %v652, 0.0
      %v694 = vmax.f32 %v655, 0.0
      %v695 = vmax.f32 %v658, 0.0
      %v696 = vmax.f32 %v661, 0.0
      %v697 = vmax.f32 %v664, 0.0
      %v698 = vld [vmem:[%s3] sm:$0xff]
      %v699 = vld [vmem:[%s3 + $0x8] sm:$0xff]
      %v700 = vld [vmem:[%s3 + $0x10] sm:$0xff]
      %v701 = vld [vmem:[%s3 + $0x18] sm:$0xff]
      %v702 = vld [vmem:[%s3 + $0x20] sm:$0xff]
      %v703 = vld [vmem:[%s3 + $0x28] sm:$0xff]
      %v704 = vld [vmem:[%s3 + $0x30] sm:$0xff]
      %v705 = vld [vmem:[%s3 + $0x38] sm:$0xff]
      %v706 = vld [vmem:[%s3 + $0x40] sm:$0xff]
      %v707 = vld [vmem:[%s3 + $0x48] sm:$0xff]
      %v708 = vld [vmem:[%s3 + $0x50] sm:$0xff]
      %v709 = vld [vmem:[%s3 + $0x58] sm:$0xff]
      %v710 = vld [vmem:[%s3 + $0x60] sm:$0xff]
      %v711 = vld [vmem:[%s3 + $0x68] sm:$0xff]
      %v712 = vld [vmem:[%s3 + $0x70] sm:$0xff]
      %v713 = vld [vmem:[%s3 + $0x78] sm:$0xff]
      %v714 = vld [vmem:[%s5] sm:$0x1]
      %v716 = vperm.slane %v714, 0
      %718 = vmatpush.msra.mxu0 %v713
      %719 = vmatpush.msra.mxu0 %v712
      %720 = vmatpush.msra.mxu0 %v711
      %721 = vmatpush.msra.mxu0 %v710
      %722 = vmatpush.msra.mxu0 %v709
      %723 = vmatpush.msra.mxu0 %v708
      %724 = vmatpush.msra.mxu0 %v707
      %725 = vmatpush.msra.mxu0 %v706
      %726 = vmatpush.msra.mxu0 %v705
      %727 = vmatpush.msra.mxu0 %v704
      %728 = vmatpush.msra.mxu0 %v703
      %729 = vmatpush.msra.mxu0 %v702
      %730 = vmatpush.msra.mxu0 %v701
      %731 = vmatpush.msra.mxu0 %v700
      %732 = vmatpush.msra.mxu0 %v699
      %733 = vmatpush.msra.mxu0 %v698
      %734 = vmatmul.f32.gmra.mxu0 %v666
      %v735 = vpop.f32.mrf.mxu0
      %v736 = vadd.f32 %v716, %v735
      %737 = vmatmul.f32.gmra.mxu0 %v667
      %v738 = vpop.f32.mrf.mxu0
      %v739 = vadd.f32 %v716, %v738
      %740 = vmatmul.f32.gmra.mxu0 %v668
      %v741 = vpop.f32.mrf.mxu0
      %v742 = vadd.f32 %v716, %v741
      %743 = vmatmul.f32.gmra.mxu0 %v669
      %v744 = vpop.f32.mrf.mxu0
      %v745 = vadd.f32 %v716, %v744
      %746 = vmatmul.f32.gmra.mxu0 %v670
      %v747 = vpop.f32.mrf.mxu0
      %v748 = vadd.f32 %v716, %v747
      %749 = vmatmul.f32.gmra.mxu0 %v671
      %v750 = vpop.f32.mrf.mxu0
      %v751 = vadd.f32 %v716, %v750
      %752 = vmatmul.f32.gmra.mxu0 %v672
      %v753 = vpop.f32.mrf.mxu0
      %v754 = vadd.f32 %v716, %v753
      %755 = vmatmul.f32.gmra.mxu0 %v673
      %v756 = vpop.f32.mrf.mxu0
      %v757 = vadd.f32 %v716, %v756
      %758 = vmatmul.f32.gmra.mxu0 %v674
      %v759 = vpop.f32.mrf.mxu0
      %v760 = vadd.f32 %v716, %v759
      %761 = vmatmul.f32.gmra.mxu0 %v675
      %v762 = vpop.f32.mrf.mxu0
      %v763 = vadd.f32 %v716, %v762
      %764 = vmatmul.f32.gmra.mxu0 %v676
      %v765 = vpop.f32.mrf.mxu0
      %v766 = vadd.f32 %v716, %v765
      %767 = vmatmul.f32.gmra.mxu0 %v677
      %v768 = vpop.f32.mrf.mxu0
      %v769 = vadd.f32 %v716, %v768
      %770 = vmatmul.f32.gmra.mxu0 %v678
      %v771 = vpop.f32.mrf.mxu0
      %v772 = vadd.f32 %v716, %v771
      %773 = vmatmul.f32.gmra.mxu0 %v679
      %v774 = vpop.f32.mrf.mxu0
      %v775 = vadd.f32 %v716, %v774
      %776 = vmatmul.f32.gmra.mxu0 %v680
      %v777 = vpop.f32.mrf.mxu0
      %v778 = vadd.f32 %v716, %v777
      %779 = vmatmul.f32.gmra.mxu0 %v681
      %v780 = vpop.f32.mrf.mxu0
      %v781 = vadd.f32 %v716, %v780
      %782 = vmatmul.f32.gmra.mxu0 %v682
      %v783 = vpop.f32.mrf.mxu0
      %v784 = vadd.f32 %v716, %v783
      %785 = vmatmul.f32.gmra.mxu0 %v683
      %v786 = vpop.f32.mrf.mxu0
      %v787 = vadd.f32 %v716, %v786
      %788 = vmatmul.f32.gmra.mxu0 %v684
      %v789 = vpop.f32.mrf.mxu0
      %v790 = vadd.f32 %v716, %v789
      %791 = vmatmul.f32.gmra.mxu0 %v685
      %v792 = vpop.f32.mrf.mxu0
      %v793 = vadd.f32 %v716, %v792
      %794 = vmatmul.f32.gmra.mxu0 %v686
      %v795 = vpop.f32.mrf.mxu0
      %v796 = vadd.f32 %v716, %v795
      %797 = vmatmul.f32.gmra.mxu0 %v687
      %v798 = vpop.f32.mrf.mxu0
      %v799 = vadd.f32 %v716, %v798
      %800 = vmatmul.f32.gmra.mxu0 %v688
      %v801 = vpop.f32.mrf.mxu0
      %v802 = vadd.f32 %v716, %v801
      %803 = vmatmul.f32.gmra.mxu0 %v689
      %v804 = vpop.f32.mrf.mxu0
      %v805 = vadd.f32 %v716, %v804
      %806 = vmatmul.f32.gmra.mxu0 %v690
      %v807 = vpop.f32.mrf.mxu0
      %v808 = vadd.f32 %v716, %v807
      %809 = vmatmul.f32.gmra.mxu0 %v691
      %v810 = vpop.f32.mrf.mxu0
      %v811 = vadd.f32 %v716, %v810
      %812 = vmatmul.f32.gmra.mxu0 %v692
      %v813 = vpop.f32.mrf.mxu0
      %v814 = vadd.f32 %v716, %v813
      %815 = vmatmul.f32.gmra.mxu0 %v693
      %v816 = vpop.f32.mrf.mxu0
      %v817 = vadd.f32 %v716, %v816
      %818 = vmatmul.f32.gmra.mxu0 %v694
      %v819 = vpop.f32.mrf.mxu0
      %v820 = vadd.f32 %v716, %v819
      %821 = vmatmul.f32.gmra.mxu0 %v695
      %v822 = vpop.f32.mrf.mxu0
      %v823 = vadd.f32 %v716, %v822
      %824 = vmatmul.f32.gmra.mxu0 %v696
      %v825 = vpop.f32.mrf.mxu0
      %v826 = vadd.f32 %v716, %v825
      %827 = vmatmul.f32.gmra.mxu0 %v697
      %v828 = vpop.f32.mrf.mxu0
      %v829 = vadd.f32 %v716, %v828
      %830 = vdwg.mxu0
      %v831 = vxor.u32 %v736, 2147483648
      %v832 = vxor.u32 %v739, 2147483648
      %v833 = vxor.u32 %v742, 2147483648
      %v834 = vxor.u32 %v745, 2147483648
      %v835 = vxor.u32 %v748, 2147483648
      %v836 = vxor.u32 %v751, 2147483648
      %v837 = vxor.u32 %v754, 2147483648
      %v838 = vxor.u32 %v757, 2147483648
      %v839 = vxor.u32 %v760, 2147483648
      %v840 = vxor.u32 %v763, 2147483648
      %v841 = vxor.u32 %v766, 2147483648
      %v842 = vxor.u32 %v769, 2147483648
      %v843 = vxor.u32 %v772, 2147483648
      %v844 = vxor.u32 %v775, 2147483648
      %v845 = vxor.u32 %v778, 2147483648
      %v846 = vxor.u32 %v781, 2147483648
      %v847 = vxor.u32 %v784, 2147483648
      %v848 = vxor.u32 %v787, 2147483648
      %v849 = vxor.u32 %v790, 2147483648
      %v850 = vxor.u32 %v793, 2147483648
      %v851 = vxor.u32 %v796, 2147483648
      %v852 = vxor.u32 %v799, 2147483648
      %v853 = vxor.u32 %v802, 2147483648
      %v854 = vxor.u32 %v805, 2147483648
      %v855 = vxor.u32 %v808, 2147483648
      %v856 = vxor.u32 %v811, 2147483648
      %v857 = vxor.u32 %v814, 2147483648
      %v858 = vxor.u32 %v817, 2147483648
      %v859 = vxor.u32 %v820, 2147483648
      %v860 = vxor.u32 %v823, 2147483648
      %v861 = vxor.u32 %v826, 2147483648
      %v862 = vxor.u32 %v829, 2147483648
      %v863 = vmul.f32 %v831, 1.442695
      %v864 = vpow.pop %v863
      %v865 = vmul.f32 %v832, 1.442695
      %v866 = vpow.pop %v865
      %v867 = vmul.f32 %v833, 1.442695
      %v868 = vpow.pop %v867
      %v869 = vmul.f32 %v834, 1.442695
      %v870 = vpow.pop %v869
      %v871 = vmul.f32 %v835, 1.442695
      %v872 = vpow.pop %v871
      %v873 = vmul.f32 %v836, 1.442695
      %v874 = vpow.pop %v873
      %v875 = vmul.f32 %v837, 1.442695
      %v876 = vpow.pop %v875
      %v877 = vmul.f32 %v838, 1.442695
      %v878 = vpow.pop %v877
      %v879 = vmul.f32 %v839, 1.442695
      %v880 = vpow.pop %v879
      %v881 = vmul.f32 %v840, 1.442695
      %v882 = vpow.pop %v881
      %v883 = vmul.f32 %v841, 1.442695
      %v884 = vpow.pop %v883
      %v885 = vmul.f32 %v842, 1.442695
      %v886 = vpow.pop %v885
      %v887 = vmul.f32 %v843, 1.442695
      %v888 = vpow.pop %v887
      %v889 = vmul.f32 %v844, 1.442695
      %v890 = vpow.pop %v889
      %v891 = vmul.f32 %v845, 1.442695
      %v892 = vpow.pop %v891
      %v893 = vmul.f32 %v846, 1.442695
      %v894 = vpow.pop %v893
      %v895 = vmul.f32 %v847, 1.442695
      %v896 = vpow.pop %v895
      %v897 = vmul.f32 %v848, 1.442695
      %v898 = vpow.pop %v897
      %v899 = vmul.f32 %v849, 1.442695
      %v900 = vpow.pop %v899
      %v901 = vmul.f32 %v850, 1.442695
      %v902 = vpow.pop %v901
      %v903 = vmul.f32 %v851, 1.442695
      %v904 = vpow.pop %v903
      %v905 = vmul.f32 %v852, 1.442695
      %v906 = vpow.pop %v905
      %v907 = vmul.f32 %v853, 1.442695
      %v908 = vpow.pop %v907
      %v909 = vmul.f32 %v854, 1.442695
      %v910 = vpow.pop %v909
      %v911 = vmul.f32 %v855, 1.442695
      %v912 = vpow.pop %v911
      %v913 = vmul.f32 %v856, 1.442695
      %v914 = vpow.pop %v913
      %v915 = vmul.f32 %v857, 1.442695
      %v916 = vpow.pop %v915
      %v917 = vmul.f32 %v858, 1.442695
      %v918 = vpow.pop %v917
      %v919 = vmul.f32 %v859, 1.442695
      %v920 = vpow.pop %v919
      %v921 = vmul.f32 %v860, 1.442695
      %v922 = vpow.pop %v921
      %v923 = vmul.f32 %v861, 1.442695
      %v924 = vpow.pop %v923
      %v925 = vmul.f32 %v862, 1.442695
      %v926 = vpow.pop %v925
      %v927 = vadd.f32 %v864, 1.0
      %v928 = vadd.f32 %v866, 1.0
      %v929 = vadd.f32 %v868, 1.0
      %v930 = vadd.f32 %v870, 1.0
      %v931 = vadd.f32 %v872, 1.0
      %v932 = vadd.f32 %v874, 1.0
      %v933 = vadd.f32 %v876, 1.0
      %v934 = vadd.f32 %v878, 1.0
      %v935 = vadd.f32 %v880, 1.0
      %v936 = vadd.f32 %v882, 1.0
      %v937 = vadd.f32 %v884, 1.0
      %v938 = vadd.f32 %v886, 1.0
      %v939 = vadd.f32 %v888, 1.0
      %v940 = vadd.f32 %v890, 1.0
      %v941 = vadd.f32 %v892, 1.0
      %v942 = vadd.f32 %v894, 1.0
      %v943 = vadd.f32 %v896, 1.0
      %v944 = vadd.f32 %v898, 1.0
      %v945 = vadd.f32 %v900, 1.0
      %v946 = vadd.f32 %v902, 1.0
      %v947 = vadd.f32 %v904, 1.0
      %v948 = vadd.f32 %v906, 1.0
      %v949 = vadd.f32 %v908, 1.0
      %v950 = vadd.f32 %v910, 1.0
      %v951 = vadd.f32 %v912, 1.0
      %v952 = vadd.f32 %v914, 1.0
      %v953 = vadd.f32 %v916, 1.0
      %v954 = vadd.f32 %v918, 1.0
      %v955 = vadd.f32 %v920, 1.0
      %v956 = vadd.f32 %v922, 1.0
      %v957 = vadd.f32 %v924, 1.0
      %v958 = vadd.f32 %v926, 1.0
      %v959 = vrcp.pop %v927
      %v960 = vmul.f32 %v927, %v959
      %v961 = vsub.f32 1.0, %v960
      %v962 = vmul.f32 %v959, %v961
      %v963 = vadd.f32 %v959, %v962
      %vm964 = vweird.f32 %v927
      %vm965 = vweird.f32 %v959
      %vm966 = vmor %vm964, %vm965
      %v967 = vsel %vm966, %v959, %v963
      %v968 = vand.u32 2147483647, %v927
      %vm969 = vcmp.eq.f32.partialorder %v968, 8.507059e+37
      %v970 = vand.u32 %v927, 2147483648
      %v971 = vor.u32 1.1754944e-38, %v970
      %v972 = vsel %vm969, %v971, %v967
      %v973 = vmul.f32 1.0, %v972
      %v974 = vrcp.pop %v928
      %v975 = vmul.f32 %v928, %v974
      %v976 = vsub.f32 1.0, %v975
      %v977 = vmul.f32 %v974, %v976
      %v978 = vadd.f32 %v974, %v977
      %vm979 = vweird.f32 %v928
      %vm980 = vweird.f32 %v974
      %vm981 = vmor %vm979, %vm980
      %v982 = vsel %vm981, %v974, %v978
      %v983 = vand.u32 2147483647, %v928
      %vm984 = vcmp.eq.f32.partialorder %v983, 8.507059e+37
      %v985 = vand.u32 %v928, 2147483648
      %v986 = vor.u32 1.1754944e-38, %v985
      %v987 = vsel %vm984, %v986, %v982
      %v988 = vmul.f32 1.0, %v987
      %v989 = vrcp.pop %v929
      %v990 = vmul.f32 %v929, %v989
      %v991 = vsub.f32 1.0, %v990
      %v992 = vmul.f32 %v989, %v991
      %v993 = vadd.f32 %v989, %v992
      %vm994 = vweird.f32 %v929
      %vm995 = vweird.f32 %v989
      %vm996 = vmor %vm994, %vm995
      %v997 = vsel %vm996, %v989, %v993
      %v998 = vand.u32 2147483647, %v929
      %vm999 = vcmp.eq.f32.partialorder %v998, 8.507059e+37
      %v1000 = vand.u32 %v929, 2147483648
      %v1001 = vor.u32 1.1754944e-38, %v1000
      %v1002 = vsel %vm999, %v1001, %v997
      %v1003 = vmul.f32 1.0, %v1002
      %v1004 = vrcp.pop %v930
      %v1005 = vmul.f32 %v930, %v1004
      %v1006 = vsub.f32 1.0, %v1005
      %v1007 = vmul.f32 %v1004, %v1006
      %v1008 = vadd.f32 %v1004, %v1007
      %vm1009 = vweird.f32 %v930
      %vm1010 = vweird.f32 %v1004
      %vm1011 = vmor %vm1009, %vm1010
      %v1012 = vsel %vm1011, %v1004, %v1008
      %v1013 = vand.u32 2147483647, %v930
      %vm1014 = vcmp.eq.f32.partialorder %v1013, 8.507059e+37
      %v1015 = vand.u32 %v930, 2147483648
      %v1016 = vor.u32 1.1754944e-38, %v1015
      %v1017 = vsel %vm1014, %v1016, %v1012
      %v1018 = vmul.f32 1.0, %v1017
      %v1019 = vrcp.pop %v931
      %v1020 = vmul.f32 %v931, %v1019
      %v1021 = vsub.f32 1.0, %v1020
      %v1022 = vmul.f32 %v1019, %v1021
      %v1023 = vadd.f32 %v1019, %v1022
      %vm1024 = vweird.f32 %v931
      %vm1025 = vweird.f32 %v1019
      %vm1026 = vmor %vm1024, %vm1025
      %v1027 = vsel %vm1026, %v1019, %v1023
      %v1028 = vand.u32 2147483647, %v931
      %vm1029 = vcmp.eq.f32.partialorder %v1028, 8.507059e+37
      %v1030 = vand.u32 %v931, 2147483648
      %v1031 = vor.u32 1.1754944e-38, %v1030
      %v1032 = vsel %vm1029, %v1031, %v1027
      %v1033 = vmul.f32 1.0, %v1032
      %v1034 = vrcp.pop %v932
      %v1035 = vmul.f32 %v932, %v1034
      %v1036 = vsub.f32 1.0, %v1035
      %v1037 = vmul.f32 %v1034, %v1036
      %v1038 = vadd.f32 %v1034, %v1037
      %vm1039 = vweird.f32 %v932
      %vm1040 = vweird.f32 %v1034
      %vm1041 = vmor %vm1039, %vm1040
      %v1042 = vsel %vm1041, %v1034, %v1038
      %v1043 = vand.u32 2147483647, %v932
      %vm1044 = vcmp.eq.f32.partialorder %v1043, 8.507059e+37
      %v1045 = vand.u32 %v932, 2147483648
      %v1046 = vor.u32 1.1754944e-38, %v1045
      %v1047 = vsel %vm1044, %v1046, %v1042
      %v1048 = vmul.f32 1.0, %v1047
      %v1049 = vrcp.pop %v933
      %v1050 = vmul.f32 %v933, %v1049
      %v1051 = vsub.f32 1.0, %v1050
      %v1052 = vmul.f32 %v1049, %v1051
      %v1053 = vadd.f32 %v1049, %v1052
      %vm1054 = vweird.f32 %v933
      %vm1055 = vweird.f32 %v1049
      %vm1056 = vmor %vm1054, %vm1055
      %v1057 = vsel %vm1056, %v1049, %v1053
      %v1058 = vand.u32 2147483647, %v933
      %vm1059 = vcmp.eq.f32.partialorder %v1058, 8.507059e+37
      %v1060 = vand.u32 %v933, 2147483648
      %v1061 = vor.u32 1.1754944e-38, %v1060
      %v1062 = vsel %vm1059, %v1061, %v1057
      %v1063 = vmul.f32 1.0, %v1062
      %v1064 = vrcp.pop %v934
      %v1065 = vmul.f32 %v934, %v1064
      %v1066 = vsub.f32 1.0, %v1065
      %v1067 = vmul.f32 %v1064, %v1066
      %v1068 = vadd.f32 %v1064, %v1067
      %vm1069 = vweird.f32 %v934
      %vm1070 = vweird.f32 %v1064
      %vm1071 = vmor %vm1069, %vm1070
      %v1072 = vsel %vm1071, %v1064, %v1068
      %v1073 = vand.u32 2147483647, %v934
      %vm1074 = vcmp.eq.f32.partialorder %v1073, 8.507059e+37
      %v1075 = vand.u32 %v934, 2147483648
      %v1076 = vor.u32 1.1754944e-38, %v1075
      %v1077 = vsel %vm1074, %v1076, %v1072
      %v1078 = vmul.f32 1.0, %v1077
      %v1079 = vrcp.pop %v935
      %v1080 = vmul.f32 %v935, %v1079
      %v1081 = vsub.f32 1.0, %v1080
      %v1082 = vmul.f32 %v1079, %v1081
      %v1083 = vadd.f32 %v1079, %v1082
      %vm1084 = vweird.f32 %v935
      %vm1085 = vweird.f32 %v1079
      %vm1086 = vmor %vm1084, %vm1085
      %v1087 = vsel %vm1086, %v1079, %v1083
      %v1088 = vand.u32 2147483647, %v935
      %vm1089 = vcmp.eq.f32.partialorder %v1088, 8.507059e+37
      %v1090 = vand.u32 %v935, 2147483648
      %v1091 = vor.u32 1.1754944e-38, %v1090
      %v1092 = vsel %vm1089, %v1091, %v1087
      %v1093 = vmul.f32 1.0, %v1092
      %v1094 = vrcp.pop %v936
      %v1095 = vmul.f32 %v936, %v1094
      %v1096 = vsub.f32 1.0, %v1095
      %v1097 = vmul.f32 %v1094, %v1096
      %v1098 = vadd.f32 %v1094, %v1097
      %vm1099 = vweird.f32 %v936
      %vm1100 = vweird.f32 %v1094
      %vm1101 = vmor %vm1099, %vm1100
      %v1102 = vsel %vm1101, %v1094, %v1098
      %v1103 = vand.u32 2147483647, %v936
      %vm1104 = vcmp.eq.f32.partialorder %v1103, 8.507059e+37
      %v1105 = vand.u32 %v936, 2147483648
      %v1106 = vor.u32 1.1754944e-38, %v1105
      %v1107 = vsel %vm1104, %v1106, %v1102
      %v1108 = vmul.f32 1.0, %v1107
      %v1109 = vrcp.pop %v937
      %v1110 = vmul.f32 %v937, %v1109
      %v1111 = vsub.f32 1.0, %v1110
      %v1112 = vmul.f32 %v1109, %v1111
      %v1113 = vadd.f32 %v1109, %v1112
      %vm1114 = vweird.f32 %v937
      %vm1115 = vweird.f32 %v1109
      %vm1116 = vmor %vm1114, %vm1115
      %v1117 = vsel %vm1116, %v1109, %v1113
      %v1118 = vand.u32 2147483647, %v937
      %vm1119 = vcmp.eq.f32.partialorder %v1118, 8.507059e+37
      %v1120 = vand.u32 %v937, 2147483648
      %v1121 = vor.u32 1.1754944e-38, %v1120
      %v1122 = vsel %vm1119, %v1121, %v1117
      %v1123 = vmul.f32 1.0, %v1122
      %v1124 = vrcp.pop %v938
      %v1125 = vmul.f32 %v938, %v1124
      %v1126 = vsub.f32 1.0, %v1125
      %v1127 = vmul.f32 %v1124, %v1126
      %v1128 = vadd.f32 %v1124, %v1127
      %vm1129 = vweird.f32 %v938
      %vm1130 = vweird.f32 %v1124
      %vm1131 = vmor %vm1129, %vm1130
      %v1132 = vsel %vm1131, %v1124, %v1128
      %v1133 = vand.u32 2147483647, %v938
      %vm1134 = vcmp.eq.f32.partialorder %v1133, 8.507059e+37
      %v1135 = vand.u32 %v938, 2147483648
      %v1136 = vor.u32 1.1754944e-38, %v1135
      %v1137 = vsel %vm1134, %v1136, %v1132
      %v1138 = vmul.f32 1.0, %v1137
      %v1139 = vrcp.pop %v939
      %v1140 = vmul.f32 %v939, %v1139
      %v1141 = vsub.f32 1.0, %v1140
      %v1142 = vmul.f32 %v1139, %v1141
      %v1143 = vadd.f32 %v1139, %v1142
      %vm1144 = vweird.f32 %v939
      %vm1145 = vweird.f32 %v1139
      %vm1146 = vmor %vm1144, %vm1145
      %v1147 = vsel %vm1146, %v1139, %v1143
      %v1148 = vand.u32 2147483647, %v939
      %vm1149 = vcmp.eq.f32.partialorder %v1148, 8.507059e+37
      %v1150 = vand.u32 %v939, 2147483648
      %v1151 = vor.u32 1.1754944e-38, %v1150
      %v1152 = vsel %vm1149, %v1151, %v1147
      %v1153 = vmul.f32 1.0, %v1152
      %v1154 = vrcp.pop %v940
      %v1155 = vmul.f32 %v940, %v1154
      %v1156 = vsub.f32 1.0, %v1155
      %v1157 = vmul.f32 %v1154, %v1156
      %v1158 = vadd.f32 %v1154, %v1157
      %vm1159 = vweird.f32 %v940
      %vm1160 = vweird.f32 %v1154
      %vm1161 = vmor %vm1159, %vm1160
      %v1162 = vsel %vm1161, %v1154, %v1158
      %v1163 = vand.u32 2147483647, %v940
      %vm1164 = vcmp.eq.f32.partialorder %v1163, 8.507059e+37
      %v1165 = vand.u32 %v940, 2147483648
      %v1166 = vor.u32 1.1754944e-38, %v1165
      %v1167 = vsel %vm1164, %v1166, %v1162
      %v1168 = vmul.f32 1.0, %v1167
      %v1169 = vrcp.pop %v941
      %v1170 = vmul.f32 %v941, %v1169
      %v1171 = vsub.f32 1.0, %v1170
      %v1172 = vmul.f32 %v1169, %v1171
      %v1173 = vadd.f32 %v1169, %v1172
      %vm1174 = vweird.f32 %v941
      %vm1175 = vweird.f32 %v1169
      %vm1176 = vmor %vm1174, %vm1175
      %v1177 = vsel %vm1176, %v1169, %v1173
      %v1178 = vand.u32 2147483647, %v941
      %vm1179 = vcmp.eq.f32.partialorder %v1178, 8.507059e+37
      %v1180 = vand.u32 %v941, 2147483648
      %v1181 = vor.u32 1.1754944e-38, %v1180
      %v1182 = vsel %vm1179, %v1181, %v1177
      %v1183 = vmul.f32 1.0, %v1182
      %v1184 = vrcp.pop %v942
      %v1185 = vmul.f32 %v942, %v1184
      %v1186 = vsub.f32 1.0, %v1185
      %v1187 = vmul.f32 %v1184, %v1186
      %v1188 = vadd.f32 %v1184, %v1187
      %vm1189 = vweird.f32 %v942
      %vm1190 = vweird.f32 %v1184
      %vm1191 = vmor %vm1189, %vm1190
      %v1192 = vsel %vm1191, %v1184, %v1188
      %v1193 = vand.u32 2147483647, %v942
      %vm1194 = vcmp.eq.f32.partialorder %v1193, 8.507059e+37
      %v1195 = vand.u32 %v942, 2147483648
      %v1196 = vor.u32 1.1754944e-38, %v1195
      %v1197 = vsel %vm1194, %v1196, %v1192
      %v1198 = vmul.f32 1.0, %v1197
      %v1199 = vrcp.pop %v943
      %v1200 = vmul.f32 %v943, %v1199
      %v1201 = vsub.f32 1.0, %v1200
      %v1202 = vmul.f32 %v1199, %v1201
      %v1203 = vadd.f32 %v1199, %v1202
      %vm1204 = vweird.f32 %v943
      %vm1205 = vweird.f32 %v1199
      %vm1206 = vmor %vm1204, %vm1205
      %v1207 = vsel %vm1206, %v1199, %v1203
      %v1208 = vand.u32 2147483647, %v943
      %vm1209 = vcmp.eq.f32.partialorder %v1208, 8.507059e+37
      %v1210 = vand.u32 %v943, 2147483648
      %v1211 = vor.u32 1.1754944e-38, %v1210
      %v1212 = vsel %vm1209, %v1211, %v1207
      %v1213 = vmul.f32 1.0, %v1212
      %v1214 = vrcp.pop %v944
      %v1215 = vmul.f32 %v944, %v1214
      %v1216 = vsub.f32 1.0, %v1215
      %v1217 = vmul.f32 %v1214, %v1216
      %v1218 = vadd.f32 %v1214, %v1217
      %vm1219 = vweird.f32 %v944
      %vm1220 = vweird.f32 %v1214
      %vm1221 = vmor %vm1219, %vm1220
      %v1222 = vsel %vm1221, %v1214, %v1218
      %v1223 = vand.u32 2147483647, %v944
      %vm1224 = vcmp.eq.f32.partialorder %v1223, 8.507059e+37
      %v1225 = vand.u32 %v944, 2147483648
      %v1226 = vor.u32 1.1754944e-38, %v1225
      %v1227 = vsel %vm1224, %v1226, %v1222
      %v1228 = vmul.f32 1.0, %v1227
      %v1229 = vrcp.pop %v945
      %v1230 = vmul.f32 %v945, %v1229
      %v1231 = vsub.f32 1.0, %v1230
      %v1232 = vmul.f32 %v1229, %v1231
      %v1233 = vadd.f32 %v1229, %v1232
      %vm1234 = vweird.f32 %v945
      %vm1235 = vweird.f32 %v1229
      %vm1236 = vmor %vm1234, %vm1235
      %v1237 = vsel %vm1236, %v1229, %v1233
      %v1238 = vand.u32 2147483647, %v945
      %vm1239 = vcmp.eq.f32.partialorder %v1238, 8.507059e+37
      %v1240 = vand.u32 %v945, 2147483648
      %v1241 = vor.u32 1.1754944e-38, %v1240
      %v1242 = vsel %vm1239, %v1241, %v1237
      %v1243 = vmul.f32 1.0, %v1242
      %v1244 = vrcp.pop %v946
      %v1245 = vmul.f32 %v946, %v1244
      %v1246 = vsub.f32 1.0, %v1245
      %v1247 = vmul.f32 %v1244, %v1246
      %v1248 = vadd.f32 %v1244, %v1247
      %vm1249 = vweird.f32 %v946
      %vm1250 = vweird.f32 %v1244
      %vm1251 = vmor %vm1249, %vm1250
      %v1252 = vsel %vm1251, %v1244, %v1248
      %v1253 = vand.u32 2147483647, %v946
      %vm1254 = vcmp.eq.f32.partialorder %v1253, 8.507059e+37
      %v1255 = vand.u32 %v946, 2147483648
      %v1256 = vor.u32 1.1754944e-38, %v1255
      %v1257 = vsel %vm1254, %v1256, %v1252
      %v1258 = vmul.f32 1.0, %v1257
      %v1259 = vrcp.pop %v947
      %v1260 = vmul.f32 %v947, %v1259
      %v1261 = vsub.f32 1.0, %v1260
      %v1262 = vmul.f32 %v1259, %v1261
      %v1263 = vadd.f32 %v1259, %v1262
      %vm1264 = vweird.f32 %v947
      %vm1265 = vweird.f32 %v1259
      %vm1266 = vmor %vm1264, %vm1265
      %v1267 = vsel %vm1266, %v1259, %v1263
      %v1268 = vand.u32 2147483647, %v947
      %vm1269 = vcmp.eq.f32.partialorder %v1268, 8.507059e+37
      %v1270 = vand.u32 %v947, 2147483648
      %v1271 = vor.u32 1.1754944e-38, %v1270
      %v1272 = vsel %vm1269, %v1271, %v1267
      %v1273 = vmul.f32 1.0, %v1272
      %v1274 = vrcp.pop %v948
      %v1275 = vmul.f32 %v948, %v1274
      %v1276 = vsub.f32 1.0, %v1275
      %v1277 = vmul.f32 %v1274, %v1276
      %v1278 = vadd.f32 %v1274, %v1277
      %vm1279 = vweird.f32 %v948
      %vm1280 = vweird.f32 %v1274
      %vm1281 = vmor %vm1279, %vm1280
      %v1282 = vsel %vm1281, %v1274, %v1278
      %v1283 = vand.u32 2147483647, %v948
      %vm1284 = vcmp.eq.f32.partialorder %v1283, 8.507059e+37
      %v1285 = vand.u32 %v948, 2147483648
      %v1286 = vor.u32 1.1754944e-38, %v1285
      %v1287 = vsel %vm1284, %v1286, %v1282
      %v1288 = vmul.f32 1.0, %v1287
      %v1289 = vrcp.pop %v949
      %v1290 = vmul.f32 %v949, %v1289
      %v1291 = vsub.f32 1.0, %v1290
      %v1292 = vmul.f32 %v1289, %v1291
      %v1293 = vadd.f32 %v1289, %v1292
      %vm1294 = vweird.f32 %v949
      %vm1295 = vweird.f32 %v1289
      %vm1296 = vmor %vm1294, %vm1295
      %v1297 = vsel %vm1296, %v1289, %v1293
      %v1298 = vand.u32 2147483647, %v949
      %vm1299 = vcmp.eq.f32.partialorder %v1298, 8.507059e+37
      %v1300 = vand.u32 %v949, 2147483648
      %v1301 = vor.u32 1.1754944e-38, %v1300
      %v1302 = vsel %vm1299, %v1301, %v1297
      %v1303 = vmul.f32 1.0, %v1302
      %v1304 = vrcp.pop %v950
      %v1305 = vmul.f32 %v950, %v1304
      %v1306 = vsub.f32 1.0, %v1305
      %v1307 = vmul.f32 %v1304, %v1306
      %v1308 = vadd.f32 %v1304, %v1307
      %vm1309 = vweird.f32 %v950
      %vm1310 = vweird.f32 %v1304
      %vm1311 = vmor %vm1309, %vm1310
      %v1312 = vsel %vm1311, %v1304, %v1308
      %v1313 = vand.u32 2147483647, %v950
      %vm1314 = vcmp.eq.f32.partialorder %v1313, 8.507059e+37
      %v1315 = vand.u32 %v950, 2147483648
      %v1316 = vor.u32 1.1754944e-38, %v1315
      %v1317 = vsel %vm1314, %v1316, %v1312
      %v1318 = vmul.f32 1.0, %v1317
      %v1319 = vrcp.pop %v951
      %v1320 = vmul.f32 %v951, %v1319
      %v1321 = vsub.f32 1.0, %v1320
      %v1322 = vmul.f32 %v1319, %v1321
      %v1323 = vadd.f32 %v1319, %v1322
      %vm1324 = vweird.f32 %v951
      %vm1325 = vweird.f32 %v1319
      %vm1326 = vmor %vm1324, %vm1325
      %v1327 = vsel %vm1326, %v1319, %v1323
      %v1328 = vand.u32 2147483647, %v951
      %vm1329 = vcmp.eq.f32.partialorder %v1328, 8.507059e+37
      %v1330 = vand.u32 %v951, 2147483648
      %v1331 = vor.u32 1.1754944e-38, %v1330
      %v1332 = vsel %vm1329, %v1331, %v1327
      %v1333 = vmul.f32 1.0, %v1332
      %v1334 = vrcp.pop %v952
      %v1335 = vmul.f32 %v952, %v1334
      %v1336 = vsub.f32 1.0, %v1335
      %v1337 = vmul.f32 %v1334, %v1336
      %v1338 = vadd.f32 %v1334, %v1337
      %vm1339 = vweird.f32 %v952
      %vm1340 = vweird.f32 %v1334
      %vm1341 = vmor %vm1339, %vm1340
      %v1342 = vsel %vm1341, %v1334, %v1338
      %v1343 = vand.u32 2147483647, %v952
      %vm1344 = vcmp.eq.f32.partialorder %v1343, 8.507059e+37
      %v1345 = vand.u32 %v952, 2147483648
      %v1346 = vor.u32 1.1754944e-38, %v1345
      %v1347 = vsel %vm1344, %v1346, %v1342
      %v1348 = vmul.f32 1.0, %v1347
      %v1349 = vrcp.pop %v953
      %v1350 = vmul.f32 %v953, %v1349
      %v1351 = vsub.f32 1.0, %v1350
      %v1352 = vmul.f32 %v1349, %v1351
      %v1353 = vadd.f32 %v1349, %v1352
      %vm1354 = vweird.f32 %v953
      %vm1355 = vweird.f32 %v1349
      %vm1356 = vmor %vm1354, %vm1355
      %v1357 = vsel %vm1356, %v1349, %v1353
      %v1358 = vand.u32 2147483647, %v953
      %vm1359 = vcmp.eq.f32.partialorder %v1358, 8.507059e+37
      %v1360 = vand.u32 %v953, 2147483648
      %v1361 = vor.u32 1.1754944e-38, %v1360
      %v1362 = vsel %vm1359, %v1361, %v1357
      %v1363 = vmul.f32 1.0, %v1362
      %v1364 = vrcp.pop %v954
      %v1365 = vmul.f32 %v954, %v1364
      %v1366 = vsub.f32 1.0, %v1365
      %v1367 = vmul.f32 %v1364, %v1366
      %v1368 = vadd.f32 %v1364, %v1367
      %vm1369 = vweird.f32 %v954
      %vm1370 = vweird.f32 %v1364
      %vm1371 = vmor %vm1369, %vm1370
      %v1372 = vsel %vm1371, %v1364, %v1368
      %v1373 = vand.u32 2147483647, %v954
      %vm1374 = vcmp.eq.f32.partialorder %v1373, 8.507059e+37
      %v1375 = vand.u32 %v954, 2147483648
      %v1376 = vor.u32 1.1754944e-38, %v1375
      %v1377 = vsel %vm1374, %v1376, %v1372
      %v1378 = vmul.f32 1.0, %v1377
      %v1379 = vrcp.pop %v955
      %v1380 = vmul.f32 %v955, %v1379
      %v1381 = vsub.f32 1.0, %v1380
      %v1382 = vmul.f32 %v1379, %v1381
      %v1383 = vadd.f32 %v1379, %v1382
      %vm1384 = vweird.f32 %v955
      %vm1385 = vweird.f32 %v1379
      %vm1386 = vmor %vm1384, %vm1385
      %v1387 = vsel %vm1386, %v1379, %v1383
      %v1388 = vand.u32 2147483647, %v955
      %vm1389 = vcmp.eq.f32.partialorder %v1388, 8.507059e+37
      %v1390 = vand.u32 %v955, 2147483648
      %v1391 = vor.u32 1.1754944e-38, %v1390
      %v1392 = vsel %vm1389, %v1391, %v1387
      %v1393 = vmul.f32 1.0, %v1392
      %v1394 = vrcp.pop %v956
      %v1395 = vmul.f32 %v956, %v1394
      %v1396 = vsub.f32 1.0, %v1395
      %v1397 = vmul.f32 %v1394, %v1396
      %v1398 = vadd.f32 %v1394, %v1397
      %vm1399 = vweird.f32 %v956
      %vm1400 = vweird.f32 %v1394
      %vm1401 = vmor %vm1399, %vm1400
      %v1402 = vsel %vm1401, %v1394, %v1398
      %v1403 = vand.u32 2147483647, %v956
      %vm1404 = vcmp.eq.f32.partialorder %v1403, 8.507059e+37
      %v1405 = vand.u32 %v956, 2147483648
      %v1406 = vor.u32 1.1754944e-38, %v1405
      %v1407 = vsel %vm1404, %v1406, %v1402
      %v1408 = vmul.f32 1.0, %v1407
      %v1409 = vrcp.pop %v957
      %v1410 = vmul.f32 %v957, %v1409
      %v1411 = vsub.f32 1.0, %v1410
      %v1412 = vmul.f32 %v1409, %v1411
      %v1413 = vadd.f32 %v1409, %v1412
      %vm1414 = vweird.f32 %v957
      %vm1415 = vweird.f32 %v1409
      %vm1416 = vmor %vm1414, %vm1415
      %v1417 = vsel %vm1416, %v1409, %v1413
      %v1418 = vand.u32 2147483647, %v957
      %vm1419 = vcmp.eq.f32.partialorder %v1418, 8.507059e+37
      %v1420 = vand.u32 %v957, 2147483648
      %v1421 = vor.u32 1.1754944e-38, %v1420
      %v1422 = vsel %vm1419, %v1421, %v1417
      %v1423 = vmul.f32 1.0, %v1422
      %v1424 = vrcp.pop %v958
      %v1425 = vmul.f32 %v958, %v1424
      %v1426 = vsub.f32 1.0, %v1425
      %v1427 = vmul.f32 %v1424, %v1426
      %v1428 = vadd.f32 %v1424, %v1427
      %vm1429 = vweird.f32 %v958
      %vm1430 = vweird.f32 %v1424
      %vm1431 = vmor %vm1429, %vm1430
      %v1432 = vsel %vm1431, %v1424, %v1428
      %v1433 = vand.u32 2147483647, %v958
      %vm1434 = vcmp.eq.f32.partialorder %v1433, 8.507059e+37
      %v1435 = vand.u32 %v958, 2147483648
      %v1436 = vor.u32 1.1754944e-38, %v1435
      %v1437 = vsel %vm1434, %v1436, %v1432
      %v1438 = vmul.f32 1.0, %v1437
      %vm1439 = vcmask 31744
      %1440 = vst.msk [vmem:[%s253] sm:$0xff] %vm1439, %v973
      %1441 = vst.msk [vmem:[%s253 + $0x8] sm:$0xff] %vm1439, %v988
      %1442 = vst.msk [vmem:[%s253 + $0x10] sm:$0xff] %vm1439, %v1003
      %1443 = vst.msk [vmem:[%s253 + $0x18] sm:$0xff] %vm1439, %v1018
      %1444 = vst.msk [vmem:[%s253 + $0x20] sm:$0xff] %vm1439, %v1033
      %1445 = vst.msk [vmem:[%s253 + $0x28] sm:$0xff] %vm1439, %v1048
      %1446 = vst.msk [vmem:[%s253 + $0x30] sm:$0xff] %vm1439, %v1063
      %1447 = vst.msk [vmem:[%s253 + $0x38] sm:$0xff] %vm1439, %v1078
      %1448 = vst.msk [vmem:[%s253 + $0x40] sm:$0xff] %vm1439, %v1093
      %1449 = vst.msk [vmem:[%s253 + $0x48] sm:$0xff] %vm1439, %v1108
      %1450 = vst.msk [vmem:[%s253 + $0x50] sm:$0xff] %vm1439, %v1123
      %1451 = vst.msk [vmem:[%s253 + $0x58] sm:$0xff] %vm1439, %v1138
      %1452 = vst.msk [vmem:[%s253 + $0x60] sm:$0xff] %vm1439, %v1153
      %1453 = vst.msk [vmem:[%s253 + $0x68] sm:$0xff] %vm1439, %v1168
      %1454 = vst.msk [vmem:[%s253 + $0x70] sm:$0xff] %vm1439, %v1183
      %1455 = vst.msk [vmem:[%s253 + $0x78] sm:$0xff] %vm1439, %v1198
      %1456 = vst.msk [vmem:[%s253 + $0x80] sm:$0xff] %vm1439, %v1213
      %1457 = vst.msk [vmem:[%s253 + $0x88] sm:$0xff] %vm1439, %v1228
      %1458 = vst.msk [vmem:[%s253 + $0x90] sm:$0xff] %vm1439, %v1243
      %1459 = vst.msk [vmem:[%s253 + $0x98] sm:$0xff] %vm1439, %v1258
      %1460 = vst.msk [vmem:[%s253 + $0xa0] sm:$0xff] %vm1439, %v1273
      %1461 = vst.msk [vmem:[%s253 + $0xa8] sm:$0xff] %vm1439, %v1288
      %1462 = vst.msk [vmem:[%s253 + $0xb0] sm:$0xff] %vm1439, %v1303
      %1463 = vst.msk [vmem:[%s253 + $0xb8] sm:$0xff] %vm1439, %v1318
      %1464 = vst.msk [vmem:[%s253 + $0xc0] sm:$0xff] %vm1439, %v1333
      %1465 = vst.msk [vmem:[%s253 + $0xc8] sm:$0xff] %vm1439, %v1348
      %1466 = vst.msk [vmem:[%s253 + $0xd0] sm:$0xff] %vm1439, %v1363
      %1467 = vst.msk [vmem:[%s253 + $0xd8] sm:$0xff] %vm1439, %v1378
      %1468 = vst.msk [vmem:[%s253 + $0xe0] sm:$0xff] %vm1439, %v1393
      %1469 = vst.msk [vmem:[%s253 + $0xe8] sm:$0xff] %vm1439, %v1408
      %1470 = vst.msk [vmem:[%s253 + $0xf0] sm:$0xff] %vm1439, %v1423
      %1471 = vst.msk [vmem:[%s253 + $0xf8] sm:$0xff] %vm1439, %v1438
      %s1472 = smul.u32 32, %s17
      %p1473 = scmp.lt.s32.totalorder %s1472, 63
      %s1474 = scalar_select %p1473, %s1472, 63
      %s1475 = smul.addr %s1474, 8
      %s1476 = scalar_lea.vmem %s6, %s1475
      // Predicated region
      $region45: #{mlp_final_forward.1} parent=43 // pred_check
        %p1477 = pneg %p166
      $region46: #{mlp_final_forward.1} parent=43 // pred_check_branch
        %1479 = sbr.rel (%p1477) target = $region48
      $region47: #{mlp_final_forward.1} parent=43 // pred_region
        %s1480 = smul.u32 32, %s17
      $region48: #{mlp_final_forward.1} parent=43 // pred_fallthru
        _
    $region44: #{mlp_final_forward.1} parent=5 // pred_fallthru
      _
    %p1481 = scmp.le.s32.totalorder 2, %s12
    // Predicated region
    $region49: #{mlp_final_forward.1} parent=5 // pred_check
      %p1482 = pneg %p1481
    $region50: #{mlp_final_forward.1} parent=5 // pred_check_branch
      %1484 = sbr.rel (%p1482) target = $region52
    $region51: #{mlp_final_forward.1} parent=5 // pred_region
      %s1485 = ssub.s32 %s12, 2
      // Predicated region
      $region53: #{mlp_final_forward.1} parent=51 // pred_check
        %p1486 = pneg %p172
      $region54: #{mlp_final_forward.1} parent=51 // pred_check_branch
        %1488 = sbr.rel (%p1486) target = $region56
      $region55: #{mlp_final_forward.1} parent=51 // pred_region
        %s1489 = smul.u32 32, %s18
        %p1490 = scmp.lt.s32.totalorder %s1489, 63
        %s1491 = scalar_select %p1490, %s1489, 63
        %s1492 = smul.addr %s1491, 8
        %s1493 = scalar_lea.vmem %s6, %s1492
      $region56: #{mlp_final_forward.1} parent=51 // pred_fallthru
        _
    $region52: #{mlp_final_forward.1} parent=5 // pred_fallthru
      _
  $region6: #{mlp_final_forward.1} parent=0 // loop_footer
    %s16 = sadd.s32 1, %s12
  $region7: #{mlp_final_forward.1} parent=0 // loop_footer_branch
    %11 = sbr.rel target = $region3
  $region8: #{mlp_final_forward.1} parent=0 // loop_exit
    _

</llo_original>
